<compile_context>
chip_gen: v6e
topology: v6e:2x2x1
jax: 0.10.0
libtpu: 0.0.40
codegen_flags: <defaults>
</compile_context>

<pallas_src>
import functools

import jax
import jax.numpy as jnp
from jax.experimental import pallas as pl
from jax.experimental.pallas import tpu as pltpu


def _round_up(x, m):
    return ((x + m - 1) // m) * m


def _padded_block_bytes(shape, dtype):
    """VMEM footprint of one block, honoring (sublane, lane) tile padding."""
    itemsize = jnp.dtype(dtype).itemsize
    if len(shape) == 0:
        return 4
    if len(shape) == 1:
        return _round_up(int(shape[0]) * itemsize, 512)
    sub = 8 * max(1, 4 // itemsize)        # 8 rows (32-bit) / 16 rows (16-bit)
    lead = 1
    for d in shape[:-2]:
        lead *= int(d)
    rows = _round_up(int(shape[-2]), sub)
    lanes = _round_up(int(shape[-1]), 128)
    return lead * rows * lanes * itemsize


def _vmem_ceiling():
    """Per-core VMEM budget ceiling, leaving headroom for Mosaic scratch/spills."""
    try:
        info = pltpu.get_tpu_info()
        phys = getattr(info, "vmem_capacity_bytes", None)
        if phys:
            return max(int(phys) - (16 << 20), 32 << 20)
    except Exception:
        pass
    # Conservative default: fits v7x's 64 MiB/TC with headroom; fine on v5e/v6e.
    return 48 << 20


# ----------------------------------------------------------------------------
# Fused direct-conv kernel (stride == 1): im2col happens in VMEM, not HBM.
# ----------------------------------------------------------------------------
def _fused_conv_kernel(x_ref, w_ref, b_ref, o_ref, *, kh, kw, h_out, w_out,
                       concat_k, flat_out):
    """One (batch, c_out-tile) grid step.

    x_ref : (1, Hp, Wp, C_in)        padded NHWC input, one batch element
    w_ref : (KH*KW*C_in, TN)         tap-major flattened weights for this tile
    b_ref : (1, TN)                  f32 bias for this tile
    o_ref : (1, h_out, w_out, TN) or (1, h_out*w_out, TN) if flat_out
    """
    c_in = x_ref.shape[-1]
    tn = w_ref.shape[-1]
    m = h_out * w_out

    def window(i, j):
        # stride-1 shifted window, flattened over the spatial dims
        return x_ref[0, i:i + h_out, j:j + w_out, :].reshape(m, c_in)

    if concat_k:
        # Small C_in: build A once in VMEM and issue ONE contraction-deep MXU
        # matmul per grid step (one relayout instead of kh*kw per-tap ones).
        a = jnp.concatenate([window(i, j) for i in range(kh) for j in range(kw)],
                            axis=-1)                         # (M, KH*KW*C_in)
        acc = jnp.dot(a, w_ref[...], preferred_element_type=jnp.float32)
        acc = acc + b_ref[...]
    else:
        # Large C_in: each tap already fills the MXU contraction depth.
        # Initialize the accumulator from the bias (no separate add pass).
        acc = jnp.broadcast_to(b_ref[...], (m, tn)).astype(jnp.float32)
        for t in range(kh * kw):
            i, j = divmod(t, kw)
            acc = acc + jnp.dot(window(i, j),
                                w_ref[t * c_in:(t + 1) * c_in, :],
                                preferred_element_type=jnp.float32)

    if flat_out:
        o_ref[0] = acc.astype(o_ref.dtype)                   # (M, TN), unpadded
    else:
        o_ref[0] = acc.reshape(h_out, w_out, tn).astype(o_ref.dtype)


def _conv2d_fused(x_nchw, weight, bias, padding, compute_dtype):
    """Direct stride-1 conv with im2col fused into VMEM.

    Returns None when the whole padded-image block would not fit the VMEM
    budget (caller then falls back to the K-tiled im2col path).
    """
    n, c_in, h, w = x_nchw.shape
    c_out, _, kh, kw = weight.shape
    hp, wp = h + 2 * padding, w + 2 * padding
    h_out, w_out = hp - kh + 1, wp - kw + 1
    k_dim = kh * kw * c_in
    out_dtype = x_nchw.dtype

    # NCHW -> NHWC + spatial zero-pad, operands cast to compute_dtype (bf16
    # halves HBM/VMEM traffic and runs the MXU at native rate; acc stays f32).
    x_p = jnp.pad(jnp.transpose(x_nchw, (0, 2, 3, 1)).astype(compute_dtype),
                  ((0, 0), (padding, padding), (padding, padding), (0, 0)))
    # OIHW -> (KH, KW, C_in, C_out) -> (K, C_out), tap-major to match the kernel.
    w_flat = jnp.transpose(weight, (2, 3, 1, 0)).reshape(k_dim, c_out)
    w_flat = w_flat.astype(compute_dtype)
    b2d = bias.reshape(1, c_out).astype(jnp.float32)

    concat_k = c_in < 128        # one deep matmul instead of kh*kw shallow ones
    small_cout = c_out < 128     # skip 128-lane padding (16x writeback for c_out=8)

    if small_cout:
        tn, nj = c_out, 1
        out_shape = (n, h_out * w_out, c_out)
        out_block = (1, h_out * w_out, c_out)
    else:
        c_out_p = _round_up(c_out, 128)
        # TN=256 feeds the full v6e/v7x MXU width; keep >= 2 grid steps so
        # v7x's two TensorCores both get work.
        tn = 256 if (c_out_p % 256 == 0 and n * (c_out_p // 256) >= 2) else 128
        nj = c_out_p // tn
        w_flat = jnp.pad(w_flat, ((0, 0), (0, c_out_p - c_out)))
        b2d = jnp.pad(b2d, ((0, 0), (0, c_out_p - c_out)))
        out_shape = (n, h_out, w_out, c_out_p)
        out_block = (1, h_out, w_out, tn)

    # ---- VMEM budget with (sublane, lane) tile padding + double buffering ----
    x_blk = _padded_block_bytes((1, hp, wp, c_in), compute_dtype)
    w_blk = _padded_block_bytes((k_dim, tn), compute_dtype)
    b_blk = _padded_block_bytes((1, tn), jnp.float32)
    o_blk = _padded_block_bytes(out_block, out_dtype)
    a_tmp = _padded_block_bytes((h_out * w_out, k_dim if concat_k else c_in),
                                compute_dtype)
    acc_tmp = _padded_block_bytes((h_out * w_out, tn), jnp.float32)
    need = 2 * (x_blk + w_blk + b_blk + o_blk) + a_tmp + acc_tmp + (4 << 20)
    ceiling = _vmem_ceiling()
    if need > ceiling:
        # TODO(synk): halo-tiled spatial blocking over h_out would keep big
        # images on this fused path; fall back to the bounded im2col path.
        return None
    vmem_limit = int(min(max(need, 16 << 20), ceiling))

    # ---- grid order: minimize re-fetched HBM bytes (weight- vs act-stationary)
    itemsize = jnp.dtype(compute_dtype).itemsize
    x_bytes = (x_p.size // n) * itemsize          # one padded image
    w_bytes = w_flat.size * itemsize              # full (padded) weight
    batch_major = (n * x_bytes + n * w_bytes) <= (w_bytes + n * nj * x_bytes)
    if batch_major:
        grid = (n, nj)
        x_map = lambda b, j: (b, 0, 0, 0)
        w_map = lambda b, j: (0, j)
        o_map = (lambda b, j: (b, 0, 0)) if small_cout else (lambda b, j: (b, 0, 0, j))
        x_fetch, w_fetch = n * x_bytes, n * w_bytes
    else:
        grid = (nj, n)
        x_map = lambda j, b: (b, 0, 0, 0)
        w_map = lambda j, b: (0, j)
        o_map = (lambda j, b: (b, 0, 0)) if small_cout else (lambda j, b: (b, 0, 0, j))
        x_fetch, w_fetch = n * nj * x_bytes, w_bytes

    out_elems = 1
    for d in out_shape:
        out_elems *= d
    cost = pl.CostEstimate(
        flops=2 * n * h_out * w_out * k_dim * c_out,          # true c_out
        transcendentals=0,
        bytes_accessed=int(x_fetch + w_fetch + b2d.size * 4
                           + out_elems * jnp.dtype(out_dtype).itemsize))

    kernel = functools.partial(_fused_conv_kernel, kh=kh, kw=kw, h_out=h_out,
                               w_out=w_out, concat_k=concat_k,
                               flat_out=small_cout)

    out = pl.pallas_call(
        kernel,
        out_shape=jax.ShapeDtypeStruct(out_shape, out_dtype),
        grid_spec=pltpu.PrefetchScalarGridSpec(
            num_scalar_prefetch=0,
            grid=grid,
            in_specs=[
                pl.BlockSpec((1, hp, wp, c_in), x_map),
                pl.BlockSpec((k_dim, tn), w_map),
                pl.BlockSpec((1, tn), w_map),
            ],
            out_specs=pl.BlockSpec(out_block, o_map),
        ),
        compiler_params=pltpu.CompilerParams(
            dimension_semantics=("parallel", "parallel"),
            vmem_limit_bytes=vmem_limit),
        cost_estimate=cost,
    )(x_p, w_flat, b2d)

    if small_cout:
        out = out.reshape(n, h_out, w_out, c_out)   # no lane padding to drop
    else:
        out = out[..., :c_out]                      # lazy depad, fused with transpose
    return jnp.transpose(out, (0, 3, 1, 2))         # NHWC -> NCHW


# ----------------------------------------------------------------------------
# Fallback: im2col + K-tiled lane-dense matmul (stride != 1, or VMEM overflow).
# ----------------------------------------------------------------------------
def _matmul_bias_kernel(a_ref, w_ref, b_ref, o_ref, acc_ref):
    k = pl.program_id(2)

    @pl.when(k == 0)
    def _():
        # Initialize the accumulator from the bias (no separate add pass).
        acc_ref[...] = jnp.broadcast_to(b_ref[...], acc_ref.shape).astype(jnp.float32)

    acc_ref[...] += jnp.dot(a_ref[...], w_ref[...],
                            preferred_element_type=jnp.float32)

    @pl.when(k == pl.num_programs(2) - 1)
    def _():
        o_ref[...] = acc_ref[...].astype(o_ref.dtype)


def _conv2d_im2col(x_nchw, weight, bias, stride, padding, compute_dtype):
    n, c_in, h, w = x_nchw.shape
    c_out, _, kh, kw = weight.shape
    out_dtype = x_nchw.dtype
    x_p = jnp.pad(jnp.transpose(x_nchw, (0, 2, 3, 1)).astype(compute_dtype),
                  ((0, 0), (padding, padding), (padding, padding), (0, 0)))
    hp, wp = h + 2 * padding, w + 2 * padding
    h_out = (hp - kh) // stride + 1
    w_out = (wp - kw) // stride + 1

    # im2col in HBM (fallback only).
    # TODO(synk): fuse the strided-window gather into the kernel like the
    # stride-1 path so the KH*KW-amplified patch matrix never hits HBM.
    cols = jnp.concatenate(
        [x_p[:, i:i + stride * h_out:stride, j:j + stride * w_out:stride, :]
         for i in range(kh) for j in range(kw)], axis=-1)
    k_dim = kh * kw * c_in
    a = cols.reshape(n * h_out * w_out, k_dim)

    c_out_p = _round_up(c_out, 128)
    w_flat = jnp.transpose(weight, (2, 3, 1, 0)).reshape(k_dim, c_out)
    w_flat = jnp.pad(w_flat.astype(compute_dtype), ((0, 0), (0, c_out_p - c_out)))
    b2d = jnp.pad(bias.reshape(1, c_out).astype(jnp.float32),
                  ((0, 0), (0, c_out_p - c_out)))

    m = a.shape[0]
    tm = min(512, _round_up(m, 8))
    m_p = _round_up(m, tm)
    # K tiling bounds the per-block VMEM footprint (v7x: 64 MiB per TC).
    if k_dim <= 512:
        tk, k_p = k_dim, k_dim
    else:
        tk = 512
        k_p = _round_up(k_dim, tk)
    if m_p != m or k_p != k_dim:
        a = jnp.pad(a, ((0, m_p - m), (0, k_p - k_dim)))
    if k_p != k_dim:
        w_flat = jnp.pad(w_flat, ((0, k_p - k_dim), (0, 0)))
    tn = 256 if (c_out_p % 256 == 0 and (m_p // tm) * (c_out_p // 256) >= 2) else 128

    need = (2 * (_padded_block_bytes((tm, tk), compute_dtype)
                 + _padded_block_bytes((tk, tn), compute_dtype)
                 + _padded_block_bytes((1, tn), jnp.float32)
                 + _padded_block_bytes((tm, tn), out_dtype))
            + _padded_block_bytes((tm, tn), jnp.float32) + (4 << 20))
    vmem_limit = int(min(max(need, 16 << 20), _vmem_ceiling()))

    out = pl.pallas_call(
        _matmul_bias_kernel,
        out_shape=jax.ShapeDtypeStruct((m_p, c_out_p), out_dtype),
        grid_spec=pltpu.PrefetchScalarGridSpec(
            num_scalar_prefetch=0,
            grid=(m_p // tm, c_out_p // tn, k_p // tk),
            in_specs=[
                pl.BlockSpec((tm, tk), lambda i, j, k: (i, k)),
                pl.BlockSpec((tk, tn), lambda i, j, k: (k, j)),
                pl.BlockSpec((1, tn), lambda i, j, k: (0, j)),
            ],
            out_specs=pl.BlockSpec((tm, tn), lambda i, j, k: (i, j)),
            scratch_shapes=[pltpu.VMEM((tm, tn), jnp.float32)],
        ),
        compiler_params=pltpu.CompilerParams(
            dimension_semantics=("parallel", "parallel", "arbitrary"),
            vmem_limit_bytes=vmem_limit),
        cost_estimate=pl.CostEstimate(
            flops=2 * m * k_dim * c_out, transcendentals=0,
            bytes_accessed=int((a.size + w_flat.size) * a.dtype.itemsize
                               + m_p * c_out_p * jnp.dtype(out_dtype).itemsize)),
    )(a, w_flat, b2d)

    out = out[:m, :c_out].reshape(n, h_out, w_out, c_out)
    return jnp.transpose(out, (0, 3, 1, 2))


@functools.partial(jax.jit, static_argnames=("stride", "padding", "compute_dtype"))
def conv2d_pallas(x_nchw, weight, bias, *, stride, padding,
                  compute_dtype=jnp.float32):
    """nn.Conv2d(C_in, C_out, K, stride, padding)(x): NCHW in/out.

    groups=1, dilation=1 (the only configuration the wrapped module can build).
    compute_dtype controls MXU operand precision; accumulation is always f32.
    """
    if stride == 1:
        out = _conv2d_fused(x_nchw, weight, bias, padding, compute_dtype)
        if out is not None:
            return out
    return _conv2d_im2col(x_nchw, weight, bias, stride, padding, compute_dtype)


# ----------------------------------------------------------------------------
# Demo / correctness checks
# ----------------------------------------------------------------------------
def _reference(x, weight, bias, stride, padding):
    return jax.lax.conv_general_dilated(
        x, weight, window_strides=(stride, stride),
        padding=[(padding, padding), (padding, padding)],
        dimension_numbers=("NCHW", "OIHW", "NCHW"),
    ) + bias.reshape(1, -1, 1, 1)


def _make_params(key, c_in, c_out, k):
    kw_, kb = jax.random.split(key)
    fan_in = c_in * k * k
    bound = 1.0 / (fan_in ** 0.5)
    weight = jax.random.uniform(kw_, (c_out, c_in, k, k), jnp.float32,
                                -bound, bound)
    bias = jax.random.uniform(kb, (c_out,), jnp.float32, -bound, bound)
    return weight, bias


if __name__ == "__main__":
    key = jax.random.PRNGKey(0)
    k0, k1, k2, k3, k4, k5 = jax.random.split(key, 6)

    # Case 1 — the module's config: Conv(4, 8, 3, stride=1, padding=1), f32.
    x = jax.random.normal(k0, (2, 4, 16, 16), jnp.float32)
    w1, b1 = _make_params(k1, 4, 8, 3)
    y = jax.block_until_ready(conv2d_pallas(x, w1, b1, stride=1, padding=1))
    y_ref = _reference(x, w1, b1, 1, 1)
    assert y.shape == (2, 8, 16, 16), y.shape
    assert jnp.allclose(y, y_ref, atol=1e-4, rtol=1e-4), \
        float(jnp.max(jnp.abs(y - y_ref)))

    # Case 2 — same conv with bf16 operands (f32 accumulation); compare against
    # a reference computed on bf16-quantized operands.
    yb = jax.block_until_ready(
        conv2d_pallas(x, w1, b1, stride=1, padding=1, compute_dtype=jnp.bfloat16))
    xq = x.astype(jnp.bfloat16).astype(jnp.float32)
    wq = w1.astype(jnp.bfloat16).astype(jnp.float32)
    yb_ref = _reference(xq, wq, b1, 1, 1)
    assert jnp.allclose(yb, yb_ref, atol=2e-2, rtol=2e-2), \
        float(jnp.max(jnp.abs(yb - yb_ref)))

    # Case 3 — wider conv: lane-dense c_out tiling + K-concat branch.
    x3 = jax.random.normal(k2, (2, 8, 16, 16), jnp.float32)
    w3, b3 = _make_params(k3, 8, 128, 3)
    y3 = jax.block_until_ready(conv2d_pallas(x3, w3, b3, stride=1, padding=1))
    y3_ref = _reference(x3, w3, b3, 1, 1)
    assert jnp.allclose(y3, y3_ref, atol=1e-4, rtol=1e-4), \
        float(jnp.max(jnp.abs(y3 - y3_ref)))

    # Case 4 — deep conv (C_in >= 128): per-tap MXU branch.
    x4 = jax.random.normal(k4, (1, 128, 8, 8), jnp.float32)
    w4, b4 = _make_params(k5, 128, 128, 3)
    y4 = jax.block_until_ready(conv2d_pallas(x4, w4, b4, stride=1, padding=1))
    y4_ref = _reference(x4, w4, b4, 1, 1)
    assert jnp.allclose(y4, y4_ref, atol=1e-3, rtol=1e-3), \
        float(jnp.max(jnp.abs(y4 - y4_ref)))

    # Case 5 — stride=2 exercises the K-tiled im2col fallback.
    y5 = jax.block_until_ready(conv2d_pallas(x, w1, b1, stride=2, padding=1))
    y5_ref = _reference(x, w1, b1, 2, 1)
    assert y5.shape == y5_ref.shape, (y5.shape, y5_ref.shape)
    assert jnp.allclose(y5, y5_ref, atol=1e-4, rtol=1e-4), \
        float(jnp.max(jnp.abs(y5 - y5_ref)))

    print("KERNEL_OK")
</pallas_src>

<mosaic_0001>
module attributes {stable_mosaic.version = 11 : i64} {
  func.func @_fused_conv_kernel(%arg0: i32, %arg1: i32, %arg2: memref<1x18x18x4xf32, #tpu.memory_space<vmem>>, %arg3: memref<36x8xf32, #tpu.memory_space<vmem>>, %arg4: memref<1x8xf32, #tpu.memory_space<vmem>>, %arg5: memref<1x256x8xf32, #tpu.memory_space<vmem>>) attributes {dimension_semantics = [#tpu.dimension_semantics<parallel>, #tpu.dimension_semantics<parallel>], iteration_bounds = array<i64: 1, 2>, scalar_prefetch = 0 : i64, scratch_operands = 0 : i64, tpu.core_type = #tpu.core_type<tc>, window_params = [{transform_indices = @transform_0, window_bounds = array<i64: 1, 18, 18, 4>}, {transform_indices = @transform_1, window_bounds = array<i64: 36, 8>}, {transform_indices = @transform_2, window_bounds = array<i64: 1, 8>}, {transform_indices = @transform_3, window_bounds = array<i64: 1, 256, 8>}]} {
    %c0 = arith.constant 0 : index
    %c0_0 = arith.constant 0 : index
    %c0_1 = arith.constant 0 : index
    %c0_2 = arith.constant 0 : index
    %0 = vector.load %arg2[%c0, %c0_0, %c0_1, %c0_2] : memref<1x18x18x4xf32, #tpu.memory_space<vmem>>, vector<1x16x16x4xf32>
    %1 = vector.shape_cast %0 : vector<1x16x16x4xf32> to vector<16x16x4xf32>
    %2 = vector.shape_cast %1 : vector<16x16x4xf32> to vector<256x4xf32>
    %c0_3 = arith.constant 0 : index
    %c0_4 = arith.constant 0 : index
    %c1 = arith.constant 1 : index
    %c0_5 = arith.constant 0 : index
    %3 = vector.load %arg2[%c0_3, %c0_4, %c1, %c0_5] : memref<1x18x18x4xf32, #tpu.memory_space<vmem>>, vector<1x16x16x4xf32>
    %4 = vector.shape_cast %3 : vector<1x16x16x4xf32> to vector<16x16x4xf32>
    %5 = vector.shape_cast %4 : vector<16x16x4xf32> to vector<256x4xf32>
    %c0_6 = arith.constant 0 : index
    %c0_7 = arith.constant 0 : index
    %c2 = arith.constant 2 : index
    %c0_8 = arith.constant 0 : index
    %6 = vector.load %arg2[%c0_6, %c0_7, %c2, %c0_8] : memref<1x18x18x4xf32, #tpu.memory_space<vmem>>, vector<1x16x16x4xf32>
    %7 = vector.shape_cast %6 : vector<1x16x16x4xf32> to vector<16x16x4xf32>
    %8 = vector.shape_cast %7 : vector<16x16x4xf32> to vector<256x4xf32>
    %c0_9 = arith.constant 0 : index
    %c1_10 = arith.constant 1 : index
    %c0_11 = arith.constant 0 : index
    %c0_12 = arith.constant 0 : index
    %9 = vector.load %arg2[%c0_9, %c1_10, %c0_11, %c0_12] : memref<1x18x18x4xf32, #tpu.memory_space<vmem>>, vector<1x16x16x4xf32>
    %10 = vector.shape_cast %9 : vector<1x16x16x4xf32> to vector<16x16x4xf32>
    %11 = vector.shape_cast %10 : vector<16x16x4xf32> to vector<256x4xf32>
    %c0_13 = arith.constant 0 : index
    %c1_14 = arith.constant 1 : index
    %c1_15 = arith.constant 1 : index
    %c0_16 = arith.constant 0 : index
    %12 = vector.load %arg2[%c0_13, %c1_14, %c1_15, %c0_16] : memref<1x18x18x4xf32, #tpu.memory_space<vmem>>, vector<1x16x16x4xf32>
    %13 = vector.shape_cast %12 : vector<1x16x16x4xf32> to vector<16x16x4xf32>
    %14 = vector.shape_cast %13 : vector<16x16x4xf32> to vector<256x4xf32>
    %c0_17 = arith.constant 0 : index
    %c1_18 = arith.constant 1 : index
    %c2_19 = arith.constant 2 : index
    %c0_20 = arith.constant 0 : index
    %15 = vector.load %arg2[%c0_17, %c1_18, %c2_19, %c0_20] : memref<1x18x18x4xf32, #tpu.memory_space<vmem>>, vector<1x16x16x4xf32>
    %16 = vector.shape_cast %15 : vector<1x16x16x4xf32> to vector<16x16x4xf32>
    %17 = vector.shape_cast %16 : vector<16x16x4xf32> to vector<256x4xf32>
    %c0_21 = arith.constant 0 : index
    %c2_22 = arith.constant 2 : index
    %c0_23 = arith.constant 0 : index
    %c0_24 = arith.constant 0 : index
    %18 = vector.load %arg2[%c0_21, %c2_22, %c0_23, %c0_24] : memref<1x18x18x4xf32, #tpu.memory_space<vmem>>, vector<1x16x16x4xf32>
    %19 = vector.shape_cast %18 : vector<1x16x16x4xf32> to vector<16x16x4xf32>
    %20 = vector.shape_cast %19 : vector<16x16x4xf32> to vector<256x4xf32>
    %c0_25 = arith.constant 0 : index
    %c2_26 = arith.constant 2 : index
    %c1_27 = arith.constant 1 : index
    %c0_28 = arith.constant 0 : index
    %21 = vector.load %arg2[%c0_25, %c2_26, %c1_27, %c0_28] : memref<1x18x18x4xf32, #tpu.memory_space<vmem>>, vector<1x16x16x4xf32>
    %22 = vector.shape_cast %21 : vector<1x16x16x4xf32> to vector<16x16x4xf32>
    %23 = vector.shape_cast %22 : vector<16x16x4xf32> to vector<256x4xf32>
    %c0_29 = arith.constant 0 : index
    %c2_30 = arith.constant 2 : index
    %c2_31 = arith.constant 2 : index
    %c0_32 = arith.constant 0 : index
    %24 = vector.load %arg2[%c0_29, %c2_30, %c2_31, %c0_32] : memref<1x18x18x4xf32, #tpu.memory_space<vmem>>, vector<1x16x16x4xf32>
    %25 = vector.shape_cast %24 : vector<1x16x16x4xf32> to vector<16x16x4xf32>
    %26 = vector.shape_cast %25 : vector<16x16x4xf32> to vector<256x4xf32>
    %27 = tpu.concatenate %2, %5, %8, %11, %14, %17, %20, %23, %26 in 1 : vector<256x4xf32>, vector<256x4xf32>, vector<256x4xf32>, vector<256x4xf32>, vector<256x4xf32>, vector<256x4xf32>, vector<256x4xf32>, vector<256x4xf32>, vector<256x4xf32> -> vector<256x36xf32>
    %c0_33 = arith.constant 0 : index
    %c0_34 = arith.constant 0 : index
    %28 = vector.load %arg3[%c0_33, %c0_34] : memref<36x8xf32, #tpu.memory_space<vmem>>, vector<36x8xf32>
    %cst = arith.constant dense<0.000000e+00> : vector<256x8xf32>
    %29 = tpu.matmul %27, %28, %cst {dimension_numbers = #tpu.dot_dimension_numbers<[1], [0], [0], [1], [0, 0, 1, 1], [], []>} : vector<256x36xf32>, vector<36x8xf32>, vector<256x8xf32> -> vector<256x8xf32>
    %c0_35 = arith.constant 0 : index
    %c0_36 = arith.constant 0 : index
    %30 = vector.load %arg4[%c0_35, %c0_36] : memref<1x8xf32, #tpu.memory_space<vmem>>, vector<1x8xf32>
    %31 = vector.broadcast %30 : vector<1x8xf32> to vector<256x8xf32>
    %32 = arith.addf %29, %31 : vector<256x8xf32>
    %c0_37 = arith.constant 0 : index
    %c0_38 = arith.constant 0 : index
    %c0_39 = arith.constant 0 : index
    %33 = vector.load %arg5[%c0_37, %c0_38, %c0_39] : memref<1x256x8xf32, #tpu.memory_space<vmem>>, vector<1x256x8xf32>
    %34 = vector.shape_cast %33 : vector<1x256x8xf32> to vector<256x8xf32>
    %35 = vector.shape_cast %32 : vector<256x8xf32> to vector<1x256x8xf32>
    tpu.vector_store %arg5[%c0_37, %c0_38, %c0_39], %35 {strides = array<i32>} : memref<1x256x8xf32, #tpu.memory_space<vmem>>, vector<1x256x8xf32>,
    return
  }
  func.func @transform_0(%arg0: i32, %arg1: i32) -> (i32, i32, i32, i32) {
    %c0_i32 = arith.constant 0 : i32
    %c0_i32_0 = arith.constant 0 : i32
    %c0_i32_1 = arith.constant 0 : i32
    %c0_i32_2 = arith.constant 0 : i32
    return %arg1, %c0_i32, %c0_i32_0, %c0_i32_1 : i32, i32, i32, i32
  }
  func.func @transform_1(%arg0: i32, %arg1: i32) -> (i32, i32) {
    %c0_i32 = arith.constant 0 : i32
    %c0_i32_0 = arith.constant 0 : i32
    return %c0_i32, %arg0 : i32, i32
  }
  func.func @transform_2(%arg0: i32, %arg1: i32) -> (i32, i32) {
    %c0_i32 = arith.constant 0 : i32
    %c0_i32_0 = arith.constant 0 : i32
    return %c0_i32, %arg0 : i32, i32
  }
  func.func @transform_3(%arg0: i32, %arg1: i32) -> (i32, i32, i32) {
    %c0_i32 = arith.constant 0 : i32
    %c0_i32_0 = arith.constant 0 : i32
    %c0_i32_1 = arith.constant 0 : i32
    return %arg1, %c0_i32, %c0_i32_0 : i32, i32, i32
  }
}

</mosaic_0001>

<llo_original>
// kernel: conv2d_pallas.1
$region0: #{conv2d_pallas.1}
  #allocation0 [shape = 'u32[]', space=smem, size = 0x4, offset = 0x4, fixed_abs, tag = 'smem constant byte address 0x4 - core index']
  #allocation1 [shape = 'u32[144,128]{1,0:T(1,128)}', space=vmem, size = 0x12000, scoped, tag = 'internal scratch']
  %s0 = inlined_call_operand.vmem [shape: f32[2,18,18,4], index: 0, kind: input, shape index: {}]
  %s1 = inlined_call_operand.vmem [shape: f32[36,8], index: 1, kind: input, shape index: {}]
  %s2 = inlined_call_operand.vmem [shape: f32[1,8], index: 2, kind: input, shape index: {}]
  %s3 = inlined_call_operand.vmem [shape: f32[2,256,8], index: 3, kind: output, shape index: {}]
  %s4 = sld [smem:[#allocation0]]
  $region45: #{conv2d_pallas.1} parent=0
    _
  %s6 = ssub.s32 1, %s4
  %s7 = scalar_select 0, %s6, %s4
  loop: start=0, step=1, limit=4
  $region2: #{conv2d_pallas.1} parent=0 // loop_pre_header
    _
  $region3: #{conv2d_pallas.1} parent=0 // loop_header
    %s9 = sphi 0, %s13
    %p10 = scmp.ge.s32.totalorder %s9, 4
    %s16 = sphi 0, %s28
    %s17 = sphi 0, %s24
    %s18 = sphi 0, %s16
    %s19 = sphi 0, %s17
    %s20 = sphi 0, %s18
    %s21 = sphi 0, %s19
    %s31 = sphi 0, %s33
    %s34 = sphi 0, %s31
    %s35 = sphi 0, %s34
    %s51 = sphi 0, %s35
    %s57 = sphi 0, %s59
    %s60 = sphi 0, %s57
    %s61 = sphi 0, %s60
    %s77 = sphi 0, %s61
    %s83 = sphi 0, %s85
    %s86 = sphi 0, %s83
    %s87 = sphi 0, %s86
    %s103 = sphi 0, %s87
    %s109 = sphi 0, %s111
    %s112 = sphi 0, %s109
    %s113 = sphi 0, %s112
    %s129 = sphi 0, %s113
  $region4: #{conv2d_pallas.1} parent=0 // loop_header_branch
    %12 = sbr.rel (%p10) target = $region8
  $region5: #{conv2d_pallas.1} parent=0 // loop_body
    %s14 = ssub.s32 %s9, 1
    %s15 = ssub.s32 %s9, 2
    %s22 = sadd.s32 1, %s17
    %p23 = scmp.ge.s32.totalorder %s22, 2
    %s24 = scalar_select %p23, 0, %s22
    %s25 = sadd.s32 1, %s16
    %s26 = scalar_select %p23, %s25, %s16
    %p27 = scmp.ge.s32.totalorder %s26, 1
    %s28 = scalar_select %p27, 0, %s26
    %s29 = ssub.s32 %s17, %s24
    %p30 = scmp.eq.s32.totalorder %s29, 0
    %s32 = sadd.s32 %s31, 1
    %s33 = scalar_select %p30, %s31, %s32
    %p36 = pneg %p30
    %p37 = scmp.eq.s32.totalorder %s9, 1
    %p38 = por %p36, %p37
    %p39 = scmp.ne.s32.totalorder %s31, %s34
    %p40 = scmp.eq.s32.totalorder %s9, 0
    %p41 = por %p39, %p40
    %p42 = scmp.ne.s32.totalorder %s31, %s34
    %p43 = scmp.eq.s32.totalorder %s14, 1
    %p44 = por %p42, %p43
    %p45 = scmp.ne.s32.totalorder %s34, %s35
    %p46 = scmp.eq.s32.totalorder %s14, 0
    %p47 = por %p45, %p46
    %p48 = scmp.ne.s32.totalorder %s34, %s35
    %p49 = scmp.eq.s32.totalorder %s15, 1
    %p50 = por %p48, %p49
    %p52 = scmp.ne.s32.totalorder %s35, %s51
    %p53 = scmp.eq.s32.totalorder %s15, 0
    %p54 = por %p52, %p53
    %s55 = ssub.s32 %s16, %s28
    %p56 = scmp.eq.s32.totalorder %s55, 0
    %s58 = sadd.s32 %s57, 1
    %s59 = scalar_select %p56, %s57, %s58
    %p62 = pneg %p56
    %p63 = scmp.eq.s32.totalorder %s9, 1
    %p64 = por %p62, %p63
    %p65 = scmp.ne.s32.totalorder %s57, %s60
    %p66 = scmp.eq.s32.totalorder %s9, 0
    %p67 = por %p65, %p66
    %p68 = scmp.ne.s32.totalorder %s57, %s60
    %p69 = scmp.eq.s32.totalorder %s14, 1
    %p70 = por %p68, %p69
    %p71 = scmp.ne.s32.totalorder %s60, %s61
    %p72 = scmp.eq.s32.totalorder %s14, 0
    %p73 = por %p71, %p72
    %p74 = scmp.ne.s32.totalorder %s60, %s61
    %p75 = scmp.eq.s32.totalorder %s15, 1
    %p76 = por %p74, %p75
    %p78 = scmp.ne.s32.totalorder %s61, %s77
    %p79 = scmp.eq.s32.totalorder %s15, 0
    %p80 = por %p78, %p79
    %s81 = ssub.s32 %s16, %s28
    %p82 = scmp.eq.s32.totalorder %s81, 0
    %s84 = sadd.s32 %s83, 1
    %s85 = scalar_select %p82, %s83, %s84
    %p88 = pneg %p82
    %p89 = scmp.eq.s32.totalorder %s9, 1
    %p90 = por %p88, %p89
    %p91 = scmp.ne.s32.totalorder %s83, %s86
    %p92 = scmp.eq.s32.totalorder %s9, 0
    %p93 = por %p91, %p92
    %p94 = scmp.ne.s32.totalorder %s83, %s86
    %p95 = scmp.eq.s32.totalorder %s14, 1
    %p96 = por %p94, %p95
    %p97 = scmp.ne.s32.totalorder %s86, %s87
    %p98 = scmp.eq.s32.totalorder %s14, 0
    %p99 = por %p97, %p98
    %p100 = scmp.ne.s32.totalorder %s86, %s87
    %p101 = scmp.eq.s32.totalorder %s15, 1
    %p102 = por %p100, %p101
    %p104 = scmp.ne.s32.totalorder %s87, %s103
    %p105 = scmp.eq.s32.totalorder %s15, 0
    %p106 = por %p104, %p105
    %s107 = ssub.s32 %s17, %s24
    %p108 = scmp.eq.s32.totalorder %s107, 0
    %s110 = sadd.s32 %s109, 1
    %s111 = scalar_select %p108, %s109, %s110
    %p114 = pneg %p108
    %p115 = scmp.eq.s32.totalorder %s9, 1
    %p116 = por %p114, %p115
    %p117 = scmp.ne.s32.totalorder %s109, %s112
    %p118 = scmp.eq.s32.totalorder %s9, 0
    %p119 = por %p117, %p118
    %p120 = scmp.ne.s32.totalorder %s109, %s112
    %p121 = scmp.eq.s32.totalorder %s14, 1
    %p122 = por %p120, %p121
    %p123 = scmp.ne.s32.totalorder %s112, %s113
    %p124 = scmp.eq.s32.totalorder %s14, 0
    %p125 = por %p123, %p124
    %p126 = scmp.ne.s32.totalorder %s112, %s113
    %p127 = scmp.eq.s32.totalorder %s15, 1
    %p128 = por %p126, %p127
    %p130 = scmp.ne.s32.totalorder %s113, %s129
    %p131 = scmp.eq.s32.totalorder %s15, 0
    %p132 = por %p130, %p131
    %p133 = scmp.le.s32.totalorder 1, %s9
    %p134 = scmp.lt.s32.totalorder %s9, 3
    %p135 = pnand %p133, %p134
    %p136 = pneg %p135
    // Predicated region
    $region9: #{conv2d_pallas.1} parent=5 // pred_check
      _
    $region10: #{conv2d_pallas.1} parent=5 // pred_check_branch
      %138 = sbr.rel (%p135) target = $region12
    $region11: #{conv2d_pallas.1} parent=5 // pred_region
      %s139 = ssub.s32 %s9, 1
      // Predicated region
      $region13: #{conv2d_pallas.1} parent=11 // pred_check
        %p140 = pneg %p73
      $region14: #{conv2d_pallas.1} parent=11 // pred_check_branch
        %142 = sbr.rel (%p140) target = $region16
      $region15: #{conv2d_pallas.1} parent=11 // pred_region
        %p143 = scmp.lt.s32.totalorder %s18, 0
        %s144 = scalar_select %p143, %s18, 0
        %s145 = smul.addr %s144, 8
        %s146 = scalar_lea.vmem %s1, %s145
      $region16: #{conv2d_pallas.1} parent=11 // pred_fallthru
        _
      // Predicated region
      $region17: #{conv2d_pallas.1} parent=11 // pred_check
        %p147 = pneg %p99
      $region18: #{conv2d_pallas.1} parent=11 // pred_check_branch
        %149 = sbr.rel (%p147) target = $region20
      $region19: #{conv2d_pallas.1} parent=11 // pred_region
        %p150 = scmp.lt.s32.totalorder %s18, 0
        %s151 = scalar_select %p150, %s18, 0
        %s152 = scalar_lea.vmem %s2, %s151
      $region20: #{conv2d_pallas.1} parent=11 // pred_fallthru
        _
    $region12: #{conv2d_pallas.1} parent=5 // pred_fallthru
      _
    %p153 = scmp.lt.s32.totalorder %s9, 2
    // Predicated region
    $region21: #{conv2d_pallas.1} parent=5 // pred_check
      %p154 = pneg %p153
    $region22: #{conv2d_pallas.1} parent=5 // pred_check_branch
      %156 = sbr.rel (%p154) target = $region24
    $region23: #{conv2d_pallas.1} parent=5 // pred_region
      // Predicated region
      $region25: #{conv2d_pallas.1} parent=23 // pred_check
        %p157 = pneg %p41
      $region26: #{conv2d_pallas.1} parent=23 // pred_check_branch
        %159 = sbr.rel (%p157) target = $region28
      $region27: #{conv2d_pallas.1} parent=23 // pred_region
        %p160 = scmp.lt.s32.totalorder %s17, 1
        %s161 = scalar_select %p160, %s17, 1
        %s162 = smul.addr %s161, 54
        %s163 = smul.addr %s162, 8
        %s164 = scalar_lea.vmem %s0, %s163
      $region28: #{conv2d_pallas.1} parent=23 // pred_fallthru
        _
    $region24: #{conv2d_pallas.1} parent=5 // pred_fallthru
      _
    %p165 = scmp.le.s32.totalorder 1, %s9
    %p166 = scmp.lt.s32.totalorder %s9, 3
    %p167 = pnand %p165, %p166
    %p168 = pneg %p167
    // Predicated region
    $region29: #{conv2d_pallas.1} parent=5 // pred_check
      _
    $region30: #{conv2d_pallas.1} parent=5 // pred_check_branch
      %170 = sbr.rel (%p167) target = $region32
    $region31: #{conv2d_pallas.1} parent=5 // pred_region
      %s171 = ssub.s32 %s9, 1
      %p172 = scmp.lt.s32.totalorder %s19, 1
      %s173 = scalar_select %p172, %s19, 1
      %s174 = smul.addr %s173, 54
      %s175 = smul.addr %s174, 8
      %s176 = scalar_lea.vmem %s0, %s175
      %p177 = pneg %p47
      %p178 = pneg %p44
      %p179 = scmp.lt.s32.totalorder %s18, 0
      %s180 = scalar_select %p179, %s18, 0
      %s181 = smul.addr %s180, 8
      %s182 = scalar_lea.vmem %s1, %s181
      %p183 = pneg %p73
      %p184 = pneg %p70
      %p185 = scmp.lt.s32.totalorder %s18, 0
      %s186 = scalar_select %p185, %s18, 0
      %s187 = scalar_lea.vmem %s2, %s186
      %p188 = pneg %p99
      %p189 = pneg %p96
      %p190 = pneg %p125
      %p191 = pneg %p122
      %p192 = scmp.lt.s32.totalorder %s19, 1
      %s193 = scalar_select %p192, %s19, 1
      %s194 = smul.addr %s193, 32
      %s195 = smul.addr %s194, 8
      %s196 = scalar_lea.vmem %s3, %s195
      %p197 = scmp.lt.s32.totalorder %s19, 1
      %s198 = scalar_select %p197, %s19, 1
      %s199 = smul.addr %s198, 54
      %s200 = smul.addr %s199, 8
      %s201 = scalar_lea.vmem %s0, %s200
      %p202 = scmp.lt.s32.totalorder %s18, 0
      %s203 = scalar_select %p202, %s18, 0
      %s204 = smul.addr %s203, 8
      %s205 = scalar_lea.vmem %s1, %s204
      %p206 = scmp.lt.s32.totalorder %s18, 0
      %s207 = scalar_select %p206, %s18, 0
      %s208 = scalar_lea.vmem %s2, %s207
      %p209 = scmp.lt.s32.totalorder %s19, 1
      %s210 = scalar_select %p209, %s19, 1
      %s211 = smul.addr %s210, 32
      %s212 = smul.addr %s211, 8
      %s213 = scalar_lea.vmem %s3, %s212
      %v214 = vld [vmem:[%s201] sm:$0xff]
      %v215 = vld [vmem:[%s201 + $0x8] sm:$0xff]
      %v216 = vld [vmem:[%s201 + $0x18] sm:$0xff]
      %v217 = vld [vmem:[%s201 + $0x20] sm:$0xff]
      %v218 = vld [vmem:[%s201 + $0x30] sm:$0xff]
      %v219 = vld [vmem:[%s201 + $0x38] sm:$0xff]
      %v220 = vld [vmem:[%s201 + $0x48] sm:$0xff]
      %v221 = vld [vmem:[%s201 + $0x50] sm:$0xff]
      %v222 = vld [vmem:[%s201 + $0x60] sm:$0xff]
      %v223 = vld [vmem:[%s201 + $0x68] sm:$0xff]
      %v224 = vld [vmem:[%s201 + $0x78] sm:$0xff]
      %v225 = vld [vmem:[%s201 + $0x80] sm:$0xff]
      %v226 = vld [vmem:[%s201 + $0x90] sm:$0xff]
      %v227 = vld [vmem:[%s201 + $0x98] sm:$0xff]
      %v228 = vld [vmem:[%s201 + $0xa8] sm:$0xff]
      %v229 = vld [vmem:[%s201 + $0xb0] sm:$0xff]
      %v230 = vld [vmem:[%s201 + $0xc0] sm:$0xff]
      %v231 = vld [vmem:[%s201 + $0xc8] sm:$0xff]
      %v232 = vld [vmem:[%s201 + $0xd8] sm:$0xff]
      %v233 = vld [vmem:[%s201 + $0xe0] sm:$0xff]
      %v234 = vld [vmem:[%s201 + $0xf0] sm:$0xff]
      %v235 = vld [vmem:[%s201 + $0xf8] sm:$0xff]
      %v236 = vld [vmem:[%s201 + $0x108] sm:$0xff]
      %v237 = vld [vmem:[%s201 + $0x110] sm:$0xff]
      %v238 = vld [vmem:[%s201 + $0x120] sm:$0xff]
      %v239 = vld [vmem:[%s201 + $0x128] sm:$0xff]
      %v240 = vld [vmem:[%s201 + $0x138] sm:$0xff]
      %v241 = vld [vmem:[%s201 + $0x140] sm:$0xff]
      %v242 = vld [vmem:[%s201 + $0x150] sm:$0xff]
      %v243 = vld [vmem:[%s201 + $0x158] sm:$0xff]
      %v244 = vld [vmem:[%s201 + $0x168] sm:$0xff]
      %v245 = vld [vmem:[%s201 + $0x170] sm:$0xff]
      %v246 = vld [vmem:[%s201 + $0x1] sm:$0xff]
      %v247 = vld [vmem:[%s201 + $0x9] sm:$0xff]
      %v248 = vld [vmem:[%s201 + $0x19] sm:$0xff]
      %v249 = vld [vmem:[%s201 + $0x21] sm:$0xff]
      %v250 = vld [vmem:[%s201 + $0x31] sm:$0xff]
      %v251 = vld [vmem:[%s201 + $0x39] sm:$0xff]
      %v252 = vld [vmem:[%s201 + $0x49] sm:$0xff]
      %v253 = vld [vmem:[%s201 + $0x51] sm:$0xff]
      %v254 = vld [vmem:[%s201 + $0x61] sm:$0xff]
      %v255 = vld [vmem:[%s201 + $0x69] sm:$0xff]
      %v256 = vld [vmem:[%s201 + $0x79] sm:$0xff]
      %v257 = vld [vmem:[%s201 + $0x81] sm:$0xff]
      %v258 = vld [vmem:[%s201 + $0x91] sm:$0xff]
      %v259 = vld [vmem:[%s201 + $0x99] sm:$0xff]
      %v260 = vld [vmem:[%s201 + $0xa9] sm:$0xff]
      %v261 = vld [vmem:[%s201 + $0xb1] sm:$0xff]
      %v262 = vld [vmem:[%s201 + $0xc1] sm:$0xff]
      %v263 = vld [vmem:[%s201 + $0xc9] sm:$0xff]
      %v264 = vld [vmem:[%s201 + $0xd9] sm:$0xff]
      %v265 = vld [vmem:[%s201 + $0xe1] sm:$0xff]
      %v266 = vld [vmem:[%s201 + $0xf1] sm:$0xff]
      %v267 = vld [vmem:[%s201 + $0xf9] sm:$0xff]
      %v268 = vld [vmem:[%s201 + $0x109] sm:$0xff]
      %v269 = vld [vmem:[%s201 + $0x111] sm:$0xff]
      %v270 = vld [vmem:[%s201 + $0x121] sm:$0xff]
      %v271 = vld [vmem:[%s201 + $0x129] sm:$0xff]
      %v272 = vld [vmem:[%s201 + $0x139] sm:$0xff]
      %v273 = vld [vmem:[%s201 + $0x141] sm:$0xff]
      %v274 = vld [vmem:[%s201 + $0x151] sm:$0xff]
      %v275 = vld [vmem:[%s201 + $0x159] sm:$0xff]
      %v276 = vld [vmem:[%s201 + $0x169] sm:$0xff]
      %v277 = vld [vmem:[%s201 + $0x171] sm:$0xff]
      %v278 = vld [vmem:[%s201 + $0x2] sm:$0xff]
      %v279 = vld [vmem:[%s201 + $0xa] sm:$0xff]
      %v280 = vld [vmem:[%s201 + $0x1a] sm:$0xff]
      %v281 = vld [vmem:[%s201 + $0x22] sm:$0xff]
      %v282 = vld [vmem:[%s201 + $0x32] sm:$0xff]
      %v283 = vld [vmem:[%s201 + $0x3a] sm:$0xff]
      %v284 = vld [vmem:[%s201 + $0x4a] sm:$0xff]
      %v285 = vld [vmem:[%s201 + $0x52] sm:$0xff]
      %v286 = vld [vmem:[%s201 + $0x62] sm:$0xff]
      %v287 = vld [vmem:[%s201 + $0x6a] sm:$0xff]
      %v288 = vld [vmem:[%s201 + $0x7a] sm:$0xff]
      %v289 = vld [vmem:[%s201 + $0x82] sm:$0xff]
      %v290 = vld [vmem:[%s201 + $0x92] sm:$0xff]
      %v291 = vld [vmem:[%s201 + $0x9a] sm:$0xff]
      %v292 = vld [vmem:[%s201 + $0xaa] sm:$0xff]
      %v293 = vld [vmem:[%s201 + $0xb2] sm:$0xff]
      %v294 = vld [vmem:[%s201 + $0xc2] sm:$0xff]
      %v295 = vld [vmem:[%s201 + $0xca] sm:$0xff]
      %v296 = vld [vmem:[%s201 + $0xda] sm:$0xff]
      %v297 = vld [vmem:[%s201 + $0xe2] sm:$0xff]
      %v298 = vld [vmem:[%s201 + $0xf2] sm:$0xff]
      %v299 = vld [vmem:[%s201 + $0xfa] sm:$0xff]
      %v300 = vld [vmem:[%s201 + $0x10a] sm:$0xff]
      %v301 = vld [vmem:[%s201 + $0x112] sm:$0xff]
      %v302 = vld [vmem:[%s201 + $0x122] sm:$0xff]
      %v303 = vld [vmem:[%s201 + $0x12a] sm:$0xff]
      %v304 = vld [vmem:[%s201 + $0x13a] sm:$0xff]
      %v305 = vld [vmem:[%s201 + $0x142] sm:$0xff]
      %v306 = vld [vmem:[%s201 + $0x152] sm:$0xff]
      %v307 = vld [vmem:[%s201 + $0x15a] sm:$0xff]
      %v308 = vld [vmem:[%s201 + $0x16a] sm:$0xff]
      %v309 = vld [vmem:[%s201 + $0x172] sm:$0xff]
      %s310 = scalar_lea.vmem %s201, 24
      %v311 = vld [vmem:[%s310] sm:$0xff]
      %v312 = vld [vmem:[%s310 + $0x8] sm:$0xff]
      %v313 = vld [vmem:[%s310 + $0x18] sm:$0xff]
      %v314 = vld [vmem:[%s310 + $0x20] sm:$0xff]
      %v315 = vld [vmem:[%s310 + $0x30] sm:$0xff]
      %v316 = vld [vmem:[%s310 + $0x38] sm:$0xff]
      %v317 = vld [vmem:[%s310 + $0x48] sm:$0xff]
      %v318 = vld [vmem:[%s310 + $0x50] sm:$0xff]
      %v319 = vld [vmem:[%s310 + $0x60] sm:$0xff]
      %v320 = vld [vmem:[%s310 + $0x68] sm:$0xff]
      %v321 = vld [vmem:[%s310 + $0x78] sm:$0xff]
      %v322 = vld [vmem:[%s310 + $0x80] sm:$0xff]
      %v323 = vld [vmem:[%s310 + $0x90] sm:$0xff]
      %v324 = vld [vmem:[%s310 + $0x98] sm:$0xff]
      %v325 = vld [vmem:[%s310 + $0xa8] sm:$0xff]
      %v326 = vld [vmem:[%s310 + $0xb0] sm:$0xff]
      %v327 = vld [vmem:[%s310 + $0xc0] sm:$0xff]
      %v328 = vld [vmem:[%s310 + $0xc8] sm:$0xff]
      %v329 = vld [vmem:[%s310 + $0xd8] sm:$0xff]
      %v330 = vld [vmem:[%s310 + $0xe0] sm:$0xff]
      %v331 = vld [vmem:[%s310 + $0xf0] sm:$0xff]
      %v332 = vld [vmem:[%s310 + $0xf8] sm:$0xff]
      %v333 = vld [vmem:[%s310 + $0x108] sm:$0xff]
      %v334 = vld [vmem:[%s310 + $0x110] sm:$0xff]
      %v335 = vld [vmem:[%s310 + $0x120] sm:$0xff]
      %v336 = vld [vmem:[%s310 + $0x128] sm:$0xff]
      %v337 = vld [vmem:[%s310 + $0x138] sm:$0xff]
      %v338 = vld [vmem:[%s310 + $0x140] sm:$0xff]
      %v339 = vld [vmem:[%s310 + $0x150] sm:$0xff]
      %v340 = vld [vmem:[%s310 + $0x158] sm:$0xff]
      %v341 = vld [vmem:[%s310 + $0x168] sm:$0xff]
      %v342 = vld [vmem:[%s310 + $0x170] sm:$0xff]
      %v343 = vld [vmem:[%s310 + $0x1] sm:$0xff]
      %v344 = vld [vmem:[%s310 + $0x9] sm:$0xff]
      %v345 = vld [vmem:[%s310 + $0x19] sm:$0xff]
      %v346 = vld [vmem:[%s310 + $0x21] sm:$0xff]
      %v347 = vld [vmem:[%s310 + $0x31] sm:$0xff]
      %v348 = vld [vmem:[%s310 + $0x39] sm:$0xff]
      %v349 = vld [vmem:[%s310 + $0x49] sm:$0xff]
      %v350 = vld [vmem:[%s310 + $0x51] sm:$0xff]
      %v351 = vld [vmem:[%s310 + $0x61] sm:$0xff]
      %v352 = vld [vmem:[%s310 + $0x69] sm:$0xff]
      %v353 = vld [vmem:[%s310 + $0x79] sm:$0xff]
      %v354 = vld [vmem:[%s310 + $0x81] sm:$0xff]
      %v355 = vld [vmem:[%s310 + $0x91] sm:$0xff]
      %v356 = vld [vmem:[%s310 + $0x99] sm:$0xff]
      %v357 = vld [vmem:[%s310 + $0xa9] sm:$0xff]
      %v358 = vld [vmem:[%s310 + $0xb1] sm:$0xff]
      %v359 = vld [vmem:[%s310 + $0xc1] sm:$0xff]
      %v360 = vld [vmem:[%s310 + $0xc9] sm:$0xff]
      %v361 = vld [vmem:[%s310 + $0xd9] sm:$0xff]
      %v362 = vld [vmem:[%s310 + $0xe1] sm:$0xff]
      %v363 = vld [vmem:[%s310 + $0xf1] sm:$0xff]
      %v364 = vld [vmem:[%s310 + $0xf9] sm:$0xff]
      %v365 = vld [vmem:[%s310 + $0x109] sm:$0xff]
      %v366 = vld [vmem:[%s310 + $0x111] sm:$0xff]
      %v367 = vld [vmem:[%s310 + $0x121] sm:$0xff]
      %v368 = vld [vmem:[%s310 + $0x129] sm:$0xff]
      %v369 = vld [vmem:[%s310 + $0x139] sm:$0xff]
      %v370 = vld [vmem:[%s310 + $0x141] sm:$0xff]
      %v371 = vld [vmem:[%s310 + $0x151] sm:$0xff]
      %v372 = vld [vmem:[%s310 + $0x159] sm:$0xff]
      %v373 = vld [vmem:[%s310 + $0x169] sm:$0xff]
      %v374 = vld [vmem:[%s310 + $0x171] sm:$0xff]
      %v375 = vld [vmem:[%s310 + $0x2] sm:$0xff]
      %v376 = vld [vmem:[%s310 + $0xa] sm:$0xff]
      %v377 = vld [vmem:[%s310 + $0x1a] sm:$0xff]
      %v378 = vld [vmem:[%s310 + $0x22] sm:$0xff]
      %v379 = vld [vmem:[%s310 + $0x32] sm:$0xff]
      %v380 = vld [vmem:[%s310 + $0x3a] sm:$0xff]
      %v381 = vld [vmem:[%s310 + $0x4a] sm:$0xff]
      %v382 = vld [vmem:[%s310 + $0x52] sm:$0xff]
      %v383 = vld [vmem:[%s310 + $0x62] sm:$0xff]
      %v384 = vld [vmem:[%s310 + $0x6a] sm:$0xff]
      %v385 = vld [vmem:[%s310 + $0x7a] sm:$0xff]
      %v386 = vld [vmem:[%s310 + $0x82] sm:$0xff]
      %v387 = vld [vmem:[%s310 + $0x92] sm:$0xff]
      %v388 = vld [vmem:[%s310 + $0x9a] sm:$0xff]
      %v389 = vld [vmem:[%s310 + $0xaa] sm:$0xff]
      %v390 = vld [vmem:[%s310 + $0xb2] sm:$0xff]
      %v391 = vld [vmem:[%s310 + $0xc2] sm:$0xff]
      %v392 = vld [vmem:[%s310 + $0xca] sm:$0xff]
      %v393 = vld [vmem:[%s310 + $0xda] sm:$0xff]
      %v394 = vld [vmem:[%s310 + $0xe2] sm:$0xff]
      %v395 = vld [vmem:[%s310 + $0xf2] sm:$0xff]
      %v396 = vld [vmem:[%s310 + $0xfa] sm:$0xff]
      %v397 = vld [vmem:[%s310 + $0x10a] sm:$0xff]
      %v398 = vld [vmem:[%s310 + $0x112] sm:$0xff]
      %v399 = vld [vmem:[%s310 + $0x122] sm:$0xff]
      %v400 = vld [vmem:[%s310 + $0x12a] sm:$0xff]
      %v401 = vld [vmem:[%s310 + $0x13a] sm:$0xff]
      %v402 = vld [vmem:[%s310 + $0x142] sm:$0xff]
      %v403 = vld [vmem:[%s310 + $0x152] sm:$0xff]
      %v404 = vld [vmem:[%s310 + $0x15a] sm:$0xff]
      %v405 = vld [vmem:[%s310 + $0x16a] sm:$0xff]
      %v406 = vld [vmem:[%s310 + $0x172] sm:$0xff]
      %s407 = scalar_lea.vmem %s201, 48
      %v408 = vld [vmem:[%s407] sm:$0xff]
      %v409 = vld [vmem:[%s407 + $0x8] sm:$0xff]
      %v410 = vld [vmem:[%s407 + $0x18] sm:$0xff]
      %v411 = vld [vmem:[%s407 + $0x20] sm:$0xff]
      %v412 = vld [vmem:[%s407 + $0x30] sm:$0xff]
      %v413 = vld [vmem:[%s407 + $0x38] sm:$0xff]
      %v414 = vld [vmem:[%s407 + $0x48] sm:$0xff]
      %v415 = vld [vmem:[%s407 + $0x50] sm:$0xff]
      %v416 = vld [vmem:[%s407 + $0x60] sm:$0xff]
      %v417 = vld [vmem:[%s407 + $0x68] sm:$0xff]
      %v418 = vld [vmem:[%s407 + $0x78] sm:$0xff]
      %v419 = vld [vmem:[%s407 + $0x80] sm:$0xff]
      %v420 = vld [vmem:[%s407 + $0x90] sm:$0xff]
      %v421 = vld [vmem:[%s407 + $0x98] sm:$0xff]
      %v422 = vld [vmem:[%s407 + $0xa8] sm:$0xff]
      %v423 = vld [vmem:[%s407 + $0xb0] sm:$0xff]
      %v424 = vld [vmem:[%s407 + $0xc0] sm:$0xff]
      %v425 = vld [vmem:[%s407 + $0xc8] sm:$0xff]
      %v426 = vld [vmem:[%s407 + $0xd8] sm:$0xff]
      %v427 = vld [vmem:[%s407 + $0xe0] sm:$0xff]
      %v428 = vld [vmem:[%s407 + $0xf0] sm:$0xff]
      %v429 = vld [vmem:[%s407 + $0xf8] sm:$0xff]
      %v430 = vld [vmem:[%s407 + $0x108] sm:$0xff]
      %v431 = vld [vmem:[%s407 + $0x110] sm:$0xff]
      %v432 = vld [vmem:[%s407 + $0x120] sm:$0xff]
      %v433 = vld [vmem:[%s407 + $0x128] sm:$0xff]
      %v434 = vld [vmem:[%s407 + $0x138] sm:$0xff]
      %v435 = vld [vmem:[%s407 + $0x140] sm:$0xff]
      %v436 = vld [vmem:[%s407 + $0x150] sm:$0xff]
      %v437 = vld [vmem:[%s407 + $0x158] sm:$0xff]
      %v438 = vld [vmem:[%s407 + $0x168] sm:$0xff]
      %v439 = vld [vmem:[%s407 + $0x170] sm:$0xff]
      %v440 = vld [vmem:[%s407 + $0x1] sm:$0xff]
      %v441 = vld [vmem:[%s407 + $0x9] sm:$0xff]
      %v442 = vld [vmem:[%s407 + $0x19] sm:$0xff]
      %v443 = vld [vmem:[%s407 + $0x21] sm:$0xff]
      %v444 = vld [vmem:[%s407 + $0x31] sm:$0xff]
      %v445 = vld [vmem:[%s407 + $0x39] sm:$0xff]
      %v446 = vld [vmem:[%s407 + $0x49] sm:$0xff]
      %v447 = vld [vmem:[%s407 + $0x51] sm:$0xff]
      %v448 = vld [vmem:[%s407 + $0x61] sm:$0xff]
      %v449 = vld [vmem:[%s407 + $0x69] sm:$0xff]
      %v450 = vld [vmem:[%s407 + $0x79] sm:$0xff]
      %v451 = vld [vmem:[%s407 + $0x81] sm:$0xff]
      %v452 = vld [vmem:[%s407 + $0x91] sm:$0xff]
      %v453 = vld [vmem:[%s407 + $0x99] sm:$0xff]
      %v454 = vld [vmem:[%s407 + $0xa9] sm:$0xff]
      %v455 = vld [vmem:[%s407 + $0xb1] sm:$0xff]
      %v456 = vld [vmem:[%s407 + $0xc1] sm:$0xff]
      %v457 = vld [vmem:[%s407 + $0xc9] sm:$0xff]
      %v458 = vld [vmem:[%s407 + $0xd9] sm:$0xff]
      %v459 = vld [vmem:[%s407 + $0xe1] sm:$0xff]
      %v460 = vld [vmem:[%s407 + $0xf1] sm:$0xff]
      %v461 = vld [vmem:[%s407 + $0xf9] sm:$0xff]
      %v462 = vld [vmem:[%s407 + $0x109] sm:$0xff]
      %v463 = vld [vmem:[%s407 + $0x111] sm:$0xff]
      %v464 = vld [vmem:[%s407 + $0x121] sm:$0xff]
      %v465 = vld [vmem:[%s407 + $0x129] sm:$0xff]
      %v466 = vld [vmem:[%s407 + $0x139] sm:$0xff]
      %v467 = vld [vmem:[%s407 + $0x141] sm:$0xff]
      %v468 = vld [vmem:[%s407 + $0x151] sm:$0xff]
      %v469 = vld [vmem:[%s407 + $0x159] sm:$0xff]
      %v470 = vld [vmem:[%s407 + $0x169] sm:$0xff]
      %v471 = vld [vmem:[%s407 + $0x171] sm:$0xff]
      %v472 = vld [vmem:[%s407 + $0x2] sm:$0xff]
      %v473 = vld [vmem:[%s407 + $0xa] sm:$0xff]
      %v474 = vld [vmem:[%s407 + $0x1a] sm:$0xff]
      %v475 = vld [vmem:[%s407 + $0x22] sm:$0xff]
      %v476 = vld [vmem:[%s407 + $0x32] sm:$0xff]
      %v477 = vld [vmem:[%s407 + $0x3a] sm:$0xff]
      %v478 = vld [vmem:[%s407 + $0x4a] sm:$0xff]
      %v479 = vld [vmem:[%s407 + $0x52] sm:$0xff]
      %v480 = vld [vmem:[%s407 + $0x62] sm:$0xff]
      %v481 = vld [vmem:[%s407 + $0x6a] sm:$0xff]
      %v482 = vld [vmem:[%s407 + $0x7a] sm:$0xff]
      %v483 = vld [vmem:[%s407 + $0x82] sm:$0xff]
      %v484 = vld [vmem:[%s407 + $0x92] sm:$0xff]
      %v485 = vld [vmem:[%s407 + $0x9a] sm:$0xff]
      %v486 = vld [vmem:[%s407 + $0xaa] sm:$0xff]
      %v487 = vld [vmem:[%s407 + $0xb2] sm:$0xff]
      %v488 = vld [vmem:[%s407 + $0xc2] sm:$0xff]
      %v489 = vld [vmem:[%s407 + $0xca] sm:$0xff]
      %v490 = vld [vmem:[%s407 + $0xda] sm:$0xff]
      %v491 = vld [vmem:[%s407 + $0xe2] sm:$0xff]
      %v492 = vld [vmem:[%s407 + $0xf2] sm:$0xff]
      %v493 = vld [vmem:[%s407 + $0xfa] sm:$0xff]
      %v494 = vld [vmem:[%s407 + $0x10a] sm:$0xff]
      %v495 = vld [vmem:[%s407 + $0x112] sm:$0xff]
      %v496 = vld [vmem:[%s407 + $0x122] sm:$0xff]
      %v497 = vld [vmem:[%s407 + $0x12a] sm:$0xff]
      %v498 = vld [vmem:[%s407 + $0x13a] sm:$0xff]
      %v499 = vld [vmem:[%s407 + $0x142] sm:$0xff]
      %v500 = vld [vmem:[%s407 + $0x152] sm:$0xff]
      %v501 = vld [vmem:[%s407 + $0x15a] sm:$0xff]
      %v502 = vld [vmem:[%s407 + $0x16a] sm:$0xff]
      %v503 = vld [vmem:[%s407 + $0x172] sm:$0xff]
      %536 = vrot.lane.b32.xlu0 %v246, 4
      %v537 = vpop.permute.xlu0 %536
      %538 = vrot.lane.b32.xlu0 %v247, 4
      %v539 = vpop.permute.xlu0 %538
      %540 = vrot.lane.b32.xlu0 %v248, 4
      %v541 = vpop.permute.xlu0 %540
      %542 = vrot.lane.b32.xlu0 %v249, 4
      %v543 = vpop.permute.xlu0 %542
      %544 = vrot.lane.b32.xlu0 %v250, 4
      %v545 = vpop.permute.xlu0 %544
      %546 = vrot.lane.b32.xlu0 %v251, 4
      %v547 = vpop.permute.xlu0 %546
      %548 = vrot.lane.b32.xlu0 %v252, 4
      %v549 = vpop.permute.xlu0 %548
      %550 = vrot.lane.b32.xlu0 %v253, 4
      %v551 = vpop.permute.xlu0 %550
      %552 = vrot.lane.b32.xlu0 %v254, 4
      %v553 = vpop.permute.xlu0 %552
      %554 = vrot.lane.b32.xlu0 %v255, 4
      %v555 = vpop.permute.xlu0 %554
      %556 = vrot.lane.b32.xlu0 %v256, 4
      %v557 = vpop.permute.xlu0 %556
      %558 = vrot.lane.b32.xlu0 %v257, 4
      %v559 = vpop.permute.xlu0 %558
      %560 = vrot.lane.b32.xlu0 %v258, 4
      %v561 = vpop.permute.xlu0 %560
      %562 = vrot.lane.b32.xlu0 %v259, 4
      %v563 = vpop.permute.xlu0 %562
      %564 = vrot.lane.b32.xlu0 %v260, 4
      %v565 = vpop.permute.xlu0 %564
      %566 = vrot.lane.b32.xlu0 %v261, 4
      %v567 = vpop.permute.xlu0 %566
      %568 = vrot.lane.b32.xlu0 %v262, 4
      %v569 = vpop.permute.xlu0 %568
      %570 = vrot.lane.b32.xlu0 %v263, 4
      %v571 = vpop.permute.xlu0 %570
      %572 = vrot.lane.b32.xlu0 %v264, 4
      %v573 = vpop.permute.xlu0 %572
      %574 = vrot.lane.b32.xlu0 %v265, 4
      %v575 = vpop.permute.xlu0 %574
      %576 = vrot.lane.b32.xlu0 %v266, 4
      %v577 = vpop.permute.xlu0 %576
      %578 = vrot.lane.b32.xlu0 %v267, 4
      %v579 = vpop.permute.xlu0 %578
      %580 = vrot.lane.b32.xlu0 %v268, 4
      %v581 = vpop.permute.xlu0 %580
      %582 = vrot.lane.b32.xlu0 %v269, 4
      %v583 = vpop.permute.xlu0 %582
      %584 = vrot.lane.b32.xlu0 %v270, 4
      %v585 = vpop.permute.xlu0 %584
      %586 = vrot.lane.b32.xlu0 %v271, 4
      %v587 = vpop.permute.xlu0 %586
      %588 = vrot.lane.b32.xlu0 %v272, 4
      %v589 = vpop.permute.xlu0 %588
      %590 = vrot.lane.b32.xlu0 %v273, 4
      %v591 = vpop.permute.xlu0 %590
      %592 = vrot.lane.b32.xlu0 %v274, 4
      %v593 = vpop.permute.xlu0 %592
      %594 = vrot.lane.b32.xlu0 %v275, 4
      %v595 = vpop.permute.xlu0 %594
      %596 = vrot.lane.b32.xlu0 %v276, 4
      %v597 = vpop.permute.xlu0 %596
      %598 = vrot.lane.b32.xlu0 %v277, 4
      %v599 = vpop.permute.xlu0 %598
      %664 = vrot.lane.b32.xlu0 %v278, 8
      %v665 = vpop.permute.xlu0 %664
      %666 = vrot.lane.b32.xlu0 %v279, 8
      %v667 = vpop.permute.xlu0 %666
      %668 = vrot.lane.b32.xlu0 %v280, 8
      %v669 = vpop.permute.xlu0 %668
      %670 = vrot.lane.b32.xlu0 %v281, 8
      %v671 = vpop.permute.xlu0 %670
      %672 = vrot.lane.b32.xlu0 %v282, 8
      %v673 = vpop.permute.xlu0 %672
      %674 = vrot.lane.b32.xlu0 %v283, 8
      %v675 = vpop.permute.xlu0 %674
      %676 = vrot.lane.b32.xlu0 %v284, 8
      %v677 = vpop.permute.xlu0 %676
      %678 = vrot.lane.b32.xlu0 %v285, 8
      %v679 = vpop.permute.xlu0 %678
      %680 = vrot.lane.b32.xlu0 %v286, 8
      %v681 = vpop.permute.xlu0 %680
      %682 = vrot.lane.b32.xlu0 %v287, 8
      %v683 = vpop.permute.xlu0 %682
      %684 = vrot.lane.b32.xlu0 %v288, 8
      %v685 = vpop.permute.xlu0 %684
      %686 = vrot.lane.b32.xlu0 %v289, 8
      %v687 = vpop.permute.xlu0 %686
      %688 = vrot.lane.b32.xlu0 %v290, 8
      %v689 = vpop.permute.xlu0 %688
      %690 = vrot.lane.b32.xlu0 %v291, 8
      %v691 = vpop.permute.xlu0 %690
      %692 = vrot.lane.b32.xlu0 %v292, 8
      %v693 = vpop.permute.xlu0 %692
      %694 = vrot.lane.b32.xlu0 %v293, 8
      %v695 = vpop.permute.xlu0 %694
      %696 = vrot.lane.b32.xlu0 %v294, 8
      %v697 = vpop.permute.xlu0 %696
      %698 = vrot.lane.b32.xlu0 %v295, 8
      %v699 = vpop.permute.xlu0 %698
      %700 = vrot.lane.b32.xlu0 %v296, 8
      %v701 = vpop.permute.xlu0 %700
      %702 = vrot.lane.b32.xlu0 %v297, 8
      %v703 = vpop.permute.xlu0 %702
      %704 = vrot.lane.b32.xlu0 %v298, 8
      %v705 = vpop.permute.xlu0 %704
      %706 = vrot.lane.b32.xlu0 %v299, 8
      %v707 = vpop.permute.xlu0 %706
      %708 = vrot.lane.b32.xlu0 %v300, 8
      %v709 = vpop.permute.xlu0 %708
      %710 = vrot.lane.b32.xlu0 %v301, 8
      %v711 = vpop.permute.xlu0 %710
      %712 = vrot.lane.b32.xlu0 %v302, 8
      %v713 = vpop.permute.xlu0 %712
      %714 = vrot.lane.b32.xlu0 %v303, 8
      %v715 = vpop.permute.xlu0 %714
      %716 = vrot.lane.b32.xlu0 %v304, 8
      %v717 = vpop.permute.xlu0 %716
      %718 = vrot.lane.b32.xlu0 %v305, 8
      %v719 = vpop.permute.xlu0 %718
      %720 = vrot.lane.b32.xlu0 %v306, 8
      %v721 = vpop.permute.xlu0 %720
      %722 = vrot.lane.b32.xlu0 %v307, 8
      %v723 = vpop.permute.xlu0 %722
      %724 = vrot.lane.b32.xlu0 %v308, 8
      %v725 = vpop.permute.xlu0 %724
      %726 = vrot.lane.b32.xlu0 %v309, 8
      %v727 = vpop.permute.xlu0 %726
      %792 = vrot.lane.b32.xlu0 %v311, 12
      %v793 = vpop.permute.xlu0 %792
      %794 = vrot.lane.b32.xlu0 %v312, 12
      %v795 = vpop.permute.xlu0 %794
      %796 = vrot.lane.b32.xlu0 %v313, 12
      %v797 = vpop.permute.xlu0 %796
      %798 = vrot.lane.b32.xlu0 %v314, 12
      %v799 = vpop.permute.xlu0 %798
      %800 = vrot.lane.b32.xlu0 %v315, 12
      %v801 = vpop.permute.xlu0 %800
      %802 = vrot.lane.b32.xlu0 %v316, 12
      %v803 = vpop.permute.xlu0 %802
      %804 = vrot.lane.b32.xlu0 %v317, 12
      %v805 = vpop.permute.xlu0 %804
      %806 = vrot.lane.b32.xlu0 %v318, 12
      %v807 = vpop.permute.xlu0 %806
      %808 = vrot.lane.b32.xlu0 %v319, 12
      %v809 = vpop.permute.xlu0 %808
      %810 = vrot.lane.b32.xlu0 %v320, 12
      %v811 = vpop.permute.xlu0 %810
      %812 = vrot.lane.b32.xlu0 %v321, 12
      %v813 = vpop.permute.xlu0 %812
      %814 = vrot.lane.b32.xlu0 %v322, 12
      %v815 = vpop.permute.xlu0 %814
      %816 = vrot.lane.b32.xlu0 %v323, 12
      %v817 = vpop.permute.xlu0 %816
      %818 = vrot.lane.b32.xlu0 %v324, 12
      %v819 = vpop.permute.xlu0 %818
      %820 = vrot.lane.b32.xlu0 %v325, 12
      %v821 = vpop.permute.xlu0 %820
      %822 = vrot.lane.b32.xlu0 %v326, 12
      %v823 = vpop.permute.xlu0 %822
      %824 = vrot.lane.b32.xlu0 %v327, 12
      %v825 = vpop.permute.xlu0 %824
      %826 = vrot.lane.b32.xlu0 %v328, 12
      %v827 = vpop.permute.xlu0 %826
      %828 = vrot.lane.b32.xlu0 %v329, 12
      %v829 = vpop.permute.xlu0 %828
      %830 = vrot.lane.b32.xlu0 %v330, 12
      %v831 = vpop.permute.xlu0 %830
      %832 = vrot.lane.b32.xlu0 %v331, 12
      %v833 = vpop.permute.xlu0 %832
      %834 = vrot.lane.b32.xlu0 %v332, 12
      %v835 = vpop.permute.xlu0 %834
      %836 = vrot.lane.b32.xlu0 %v333, 12
      %v837 = vpop.permute.xlu0 %836
      %838 = vrot.lane.b32.xlu0 %v334, 12
      %v839 = vpop.permute.xlu0 %838
      %840 = vrot.lane.b32.xlu0 %v335, 12
      %v841 = vpop.permute.xlu0 %840
      %842 = vrot.lane.b32.xlu0 %v336, 12
      %v843 = vpop.permute.xlu0 %842
      %844 = vrot.lane.b32.xlu0 %v337, 12
      %v845 = vpop.permute.xlu0 %844
      %846 = vrot.lane.b32.xlu0 %v338, 12
      %v847 = vpop.permute.xlu0 %846
      %848 = vrot.lane.b32.xlu0 %v339, 12
      %v849 = vpop.permute.xlu0 %848
      %850 = vrot.lane.b32.xlu0 %v340, 12
      %v851 = vpop.permute.xlu0 %850
      %852 = vrot.lane.b32.xlu0 %v341, 12
      %v853 = vpop.permute.xlu0 %852
      %854 = vrot.lane.b32.xlu0 %v342, 12
      %v855 = vpop.permute.xlu0 %854
      %920 = vrot.lane.b32.xlu0 %v343, 16
      %v921 = vpop.permute.xlu0 %920
      %922 = vrot.lane.b32.xlu0 %v344, 16
      %v923 = vpop.permute.xlu0 %922
      %924 = vrot.lane.b32.xlu0 %v345, 16
      %v925 = vpop.permute.xlu0 %924
      %926 = vrot.lane.b32.xlu0 %v346, 16
      %v927 = vpop.permute.xlu0 %926
      %928 = vrot.lane.b32.xlu0 %v347, 16
      %v929 = vpop.permute.xlu0 %928
      %930 = vrot.lane.b32.xlu0 %v348, 16
      %v931 = vpop.permute.xlu0 %930
      %932 = vrot.lane.b32.xlu0 %v349, 16
      %v933 = vpop.permute.xlu0 %932
      %934 = vrot.lane.b32.xlu0 %v350, 16
      %v935 = vpop.permute.xlu0 %934
      %936 = vrot.lane.b32.xlu0 %v351, 16
      %v937 = vpop.permute.xlu0 %936
      %938 = vrot.lane.b32.xlu0 %v352, 16
      %v939 = vpop.permute.xlu0 %938
      %940 = vrot.lane.b32.xlu0 %v353, 16
      %v941 = vpop.permute.xlu0 %940
      %942 = vrot.lane.b32.xlu0 %v354, 16
      %v943 = vpop.permute.xlu0 %942
      %944 = vrot.lane.b32.xlu0 %v355, 16
      %v945 = vpop.permute.xlu0 %944
      %946 = vrot.lane.b32.xlu0 %v356, 16
      %v947 = vpop.permute.xlu0 %946
      %948 = vrot.lane.b32.xlu0 %v357, 16
      %v949 = vpop.permute.xlu0 %948
      %950 = vrot.lane.b32.xlu0 %v358, 16
      %v951 = vpop.permute.xlu0 %950
      %952 = vrot.lane.b32.xlu0 %v359, 16
      %v953 = vpop.permute.xlu0 %952
      %954 = vrot.lane.b32.xlu0 %v360, 16
      %v955 = vpop.permute.xlu0 %954
      %956 = vrot.lane.b32.xlu0 %v361, 16
      %v957 = vpop.permute.xlu0 %956
      %958 = vrot.lane.b32.xlu0 %v362, 16
      %v959 = vpop.permute.xlu0 %958
      %960 = vrot.lane.b32.xlu0 %v363, 16
      %v961 = vpop.permute.xlu0 %960
      %962 = vrot.lane.b32.xlu0 %v364, 16
      %v963 = vpop.permute.xlu0 %962
      %964 = vrot.lane.b32.xlu0 %v365, 16
      %v965 = vpop.permute.xlu0 %964
      %966 = vrot.lane.b32.xlu0 %v366, 16
      %v967 = vpop.permute.xlu0 %966
      %968 = vrot.lane.b32.xlu0 %v367, 16
      %v969 = vpop.permute.xlu0 %968
      %970 = vrot.lane.b32.xlu0 %v368, 16
      %v971 = vpop.permute.xlu0 %970
      %972 = vrot.lane.b32.xlu0 %v369, 16
      %v973 = vpop.permute.xlu0 %972
      %974 = vrot.lane.b32.xlu0 %v370, 16
      %v975 = vpop.permute.xlu0 %974
      %976 = vrot.lane.b32.xlu0 %v371, 16
      %v977 = vpop.permute.xlu0 %976
      %978 = vrot.lane.b32.xlu0 %v372, 16
      %v979 = vpop.permute.xlu0 %978
      %980 = vrot.lane.b32.xlu0 %v373, 16
      %v981 = vpop.permute.xlu0 %980
      %982 = vrot.lane.b32.xlu0 %v374, 16
      %v983 = vpop.permute.xlu0 %982
      %1048 = vrot.lane.b32.xlu0 %v375, 20
      %v1049 = vpop.permute.xlu0 %1048
      %1050 = vrot.lane.b32.xlu0 %v376, 20
      %v1051 = vpop.permute.xlu0 %1050
      %1052 = vrot.lane.b32.xlu0 %v377, 20
      %v1053 = vpop.permute.xlu0 %1052
      %1054 = vrot.lane.b32.xlu0 %v378, 20
      %v1055 = vpop.permute.xlu0 %1054
      %1056 = vrot.lane.b32.xlu0 %v379, 20
      %v1057 = vpop.permute.xlu0 %1056
      %1058 = vrot.lane.b32.xlu0 %v380, 20
      %v1059 = vpop.permute.xlu0 %1058
      %1060 = vrot.lane.b32.xlu0 %v381, 20
      %v1061 = vpop.permute.xlu0 %1060
      %1062 = vrot.lane.b32.xlu0 %v382, 20
      %v1063 = vpop.permute.xlu0 %1062
      %1064 = vrot.lane.b32.xlu0 %v383, 20
      %v1065 = vpop.permute.xlu0 %1064
      %1066 = vrot.lane.b32.xlu0 %v384, 20
      %v1067 = vpop.permute.xlu0 %1066
      %1068 = vrot.lane.b32.xlu0 %v385, 20
      %v1069 = vpop.permute.xlu0 %1068
      %1070 = vrot.lane.b32.xlu0 %v386, 20
      %v1071 = vpop.permute.xlu0 %1070
      %1072 = vrot.lane.b32.xlu0 %v387, 20
      %v1073 = vpop.permute.xlu0 %1072
      %1074 = vrot.lane.b32.xlu0 %v388, 20
      %v1075 = vpop.permute.xlu0 %1074
      %1076 = vrot.lane.b32.xlu0 %v389, 20
      %v1077 = vpop.permute.xlu0 %1076
      %1078 = vrot.lane.b32.xlu0 %v390, 20
      %v1079 = vpop.permute.xlu0 %1078
      %1080 = vrot.lane.b32.xlu0 %v391, 20
      %v1081 = vpop.permute.xlu0 %1080
      %1082 = vrot.lane.b32.xlu0 %v392, 20
      %v1083 = vpop.permute.xlu0 %1082
      %1084 = vrot.lane.b32.xlu0 %v393, 20
      %v1085 = vpop.permute.xlu0 %1084
      %1086 = vrot.lane.b32.xlu0 %v394, 20
      %v1087 = vpop.permute.xlu0 %1086
      %1088 = vrot.lane.b32.xlu0 %v395, 20
      %v1089 = vpop.permute.xlu0 %1088
      %1090 = vrot.lane.b32.xlu0 %v396, 20
      %v1091 = vpop.permute.xlu0 %1090
      %1092 = vrot.lane.b32.xlu0 %v397, 20
      %v1093 = vpop.permute.xlu0 %1092
      %1094 = vrot.lane.b32.xlu0 %v398, 20
      %v1095 = vpop.permute.xlu0 %1094
      %1096 = vrot.lane.b32.xlu0 %v399, 20
      %v1097 = vpop.permute.xlu0 %1096
      %1098 = vrot.lane.b32.xlu0 %v400, 20
      %v1099 = vpop.permute.xlu0 %1098
      %1100 = vrot.lane.b32.xlu0 %v401, 20
      %v1101 = vpop.permute.xlu0 %1100
      %1102 = vrot.lane.b32.xlu0 %v402, 20
      %v1103 = vpop.permute.xlu0 %1102
      %1104 = vrot.lane.b32.xlu0 %v403, 20
      %v1105 = vpop.permute.xlu0 %1104
      %1106 = vrot.lane.b32.xlu0 %v404, 20
      %v1107 = vpop.permute.xlu0 %1106
      %1108 = vrot.lane.b32.xlu0 %v405, 20
      %v1109 = vpop.permute.xlu0 %1108
      %1110 = vrot.lane.b32.xlu0 %v406, 20
      %v1111 = vpop.permute.xlu0 %1110
      %1176 = vrot.lane.b32.xlu0 %v408, 24
      %v1177 = vpop.permute.xlu0 %1176
      %1178 = vrot.lane.b32.xlu0 %v409, 24
      %v1179 = vpop.permute.xlu0 %1178
      %1180 = vrot.lane.b32.xlu0 %v410, 24
      %v1181 = vpop.permute.xlu0 %1180
      %1182 = vrot.lane.b32.xlu0 %v411, 24
      %v1183 = vpop.permute.xlu0 %1182
      %1184 = vrot.lane.b32.xlu0 %v412, 24
      %v1185 = vpop.permute.xlu0 %1184
      %1186 = vrot.lane.b32.xlu0 %v413, 24
      %v1187 = vpop.permute.xlu0 %1186
      %1188 = vrot.lane.b32.xlu0 %v414, 24
      %v1189 = vpop.permute.xlu0 %1188
      %1190 = vrot.lane.b32.xlu0 %v415, 24
      %v1191 = vpop.permute.xlu0 %1190
      %1192 = vrot.lane.b32.xlu0 %v416, 24
      %v1193 = vpop.permute.xlu0 %1192
      %1194 = vrot.lane.b32.xlu0 %v417, 24
      %v1195 = vpop.permute.xlu0 %1194
      %1196 = vrot.lane.b32.xlu0 %v418, 24
      %v1197 = vpop.permute.xlu0 %1196
      %1198 = vrot.lane.b32.xlu0 %v419, 24
      %v1199 = vpop.permute.xlu0 %1198
      %1200 = vrot.lane.b32.xlu0 %v420, 24
      %v1201 = vpop.permute.xlu0 %1200
      %1202 = vrot.lane.b32.xlu0 %v421, 24
      %v1203 = vpop.permute.xlu0 %1202
      %1204 = vrot.lane.b32.xlu0 %v422, 24
      %v1205 = vpop.permute.xlu0 %1204
      %1206 = vrot.lane.b32.xlu0 %v423, 24
      %v1207 = vpop.permute.xlu0 %1206
      %1208 = vrot.lane.b32.xlu0 %v424, 24
      %v1209 = vpop.permute.xlu0 %1208
      %1210 = vrot.lane.b32.xlu0 %v425, 24
      %v1211 = vpop.permute.xlu0 %1210
      %1212 = vrot.lane.b32.xlu0 %v426, 24
      %v1213 = vpop.permute.xlu0 %1212
      %1214 = vrot.lane.b32.xlu0 %v427, 24
      %v1215 = vpop.permute.xlu0 %1214
      %1216 = vrot.lane.b32.xlu0 %v428, 24
      %v1217 = vpop.permute.xlu0 %1216
      %1218 = vrot.lane.b32.xlu0 %v429, 24
      %v1219 = vpop.permute.xlu0 %1218
      %1220 = vrot.lane.b32.xlu0 %v430, 24
      %v1221 = vpop.permute.xlu0 %1220
      %1222 = vrot.lane.b32.xlu0 %v431, 24
      %v1223 = vpop.permute.xlu0 %1222
      %1224 = vrot.lane.b32.xlu0 %v432, 24
      %v1225 = vpop.permute.xlu0 %1224
      %1226 = vrot.lane.b32.xlu0 %v433, 24
      %v1227 = vpop.permute.xlu0 %1226
      %1228 = vrot.lane.b32.xlu0 %v434, 24
      %v1229 = vpop.permute.xlu0 %1228
      %1230 = vrot.lane.b32.xlu0 %v435, 24
      %v1231 = vpop.permute.xlu0 %1230
      %1232 = vrot.lane.b32.xlu0 %v436, 24
      %v1233 = vpop.permute.xlu0 %1232
      %1234 = vrot.lane.b32.xlu0 %v437, 24
      %v1235 = vpop.permute.xlu0 %1234
      %1236 = vrot.lane.b32.xlu0 %v438, 24
      %v1237 = vpop.permute.xlu0 %1236
      %1238 = vrot.lane.b32.xlu0 %v439, 24
      %v1239 = vpop.permute.xlu0 %1238
      %1304 = vrot.lane.b32.xlu0 %v440, 28
      %v1305 = vpop.permute.xlu0 %1304
      %1306 = vrot.lane.b32.xlu0 %v441, 28
      %v1307 = vpop.permute.xlu0 %1306
      %1308 = vrot.lane.b32.xlu0 %v442, 28
      %v1309 = vpop.permute.xlu0 %1308
      %1310 = vrot.lane.b32.xlu0 %v443, 28
      %v1311 = vpop.permute.xlu0 %1310
      %1312 = vrot.lane.b32.xlu0 %v444, 28
      %v1313 = vpop.permute.xlu0 %1312
      %1314 = vrot.lane.b32.xlu0 %v445, 28
      %v1315 = vpop.permute.xlu0 %1314
      %1316 = vrot.lane.b32.xlu0 %v446, 28
      %v1317 = vpop.permute.xlu0 %1316
      %1318 = vrot.lane.b32.xlu0 %v447, 28
      %v1319 = vpop.permute.xlu0 %1318
      %1320 = vrot.lane.b32.xlu0 %v448, 28
      %v1321 = vpop.permute.xlu0 %1320
      %1322 = vrot.lane.b32.xlu0 %v449, 28
      %v1323 = vpop.permute.xlu0 %1322
      %1324 = vrot.lane.b32.xlu0 %v450, 28
      %v1325 = vpop.permute.xlu0 %1324
      %1326 = vrot.lane.b32.xlu0 %v451, 28
      %v1327 = vpop.permute.xlu0 %1326
      %1328 = vrot.lane.b32.xlu0 %v452, 28
      %v1329 = vpop.permute.xlu0 %1328
      %1330 = vrot.lane.b32.xlu0 %v453, 28
      %v1331 = vpop.permute.xlu0 %1330
      %1332 = vrot.lane.b32.xlu0 %v454, 28
      %v1333 = vpop.permute.xlu0 %1332
      %1334 = vrot.lane.b32.xlu0 %v455, 28
      %v1335 = vpop.permute.xlu0 %1334
      %1336 = vrot.lane.b32.xlu0 %v456, 28
      %v1337 = vpop.permute.xlu0 %1336
      %1338 = vrot.lane.b32.xlu0 %v457, 28
      %v1339 = vpop.permute.xlu0 %1338
      %1340 = vrot.lane.b32.xlu0 %v458, 28
      %v1341 = vpop.permute.xlu0 %1340
      %1342 = vrot.lane.b32.xlu0 %v459, 28
      %v1343 = vpop.permute.xlu0 %1342
      %1344 = vrot.lane.b32.xlu0 %v460, 28
      %v1345 = vpop.permute.xlu0 %1344
      %1346 = vrot.lane.b32.xlu0 %v461, 28
      %v1347 = vpop.permute.xlu0 %1346
      %1348 = vrot.lane.b32.xlu0 %v462, 28
      %v1349 = vpop.permute.xlu0 %1348
      %1350 = vrot.lane.b32.xlu0 %v463, 28
      %v1351 = vpop.permute.xlu0 %1350
      %1352 = vrot.lane.b32.xlu0 %v464, 28
      %v1353 = vpop.permute.xlu0 %1352
      %1354 = vrot.lane.b32.xlu0 %v465, 28
      %v1355 = vpop.permute.xlu0 %1354
      %1356 = vrot.lane.b32.xlu0 %v466, 28
      %v1357 = vpop.permute.xlu0 %1356
      %1358 = vrot.lane.b32.xlu0 %v467, 28
      %v1359 = vpop.permute.xlu0 %1358
      %1360 = vrot.lane.b32.xlu0 %v468, 28
      %v1361 = vpop.permute.xlu0 %1360
      %1362 = vrot.lane.b32.xlu0 %v469, 28
      %v1363 = vpop.permute.xlu0 %1362
      %1364 = vrot.lane.b32.xlu0 %v470, 28
      %v1365 = vpop.permute.xlu0 %1364
      %1366 = vrot.lane.b32.xlu0 %v471, 28
      %v1367 = vpop.permute.xlu0 %1366
      %1432 = vrot.lane.b32.xlu0 %v472, 32
      %v1433 = vpop.permute.xlu0 %1432
      %1434 = vrot.lane.b32.xlu0 %v473, 32
      %v1435 = vpop.permute.xlu0 %1434
      %1436 = vrot.lane.b32.xlu0 %v474, 32
      %v1437 = vpop.permute.xlu0 %1436
      %1438 = vrot.lane.b32.xlu0 %v475, 32
      %v1439 = vpop.permute.xlu0 %1438
      %1440 = vrot.lane.b32.xlu0 %v476, 32
      %v1441 = vpop.permute.xlu0 %1440
      %1442 = vrot.lane.b32.xlu0 %v477, 32
      %v1443 = vpop.permute.xlu0 %1442
      %1444 = vrot.lane.b32.xlu0 %v478, 32
      %v1445 = vpop.permute.xlu0 %1444
      %1446 = vrot.lane.b32.xlu0 %v479, 32
      %v1447 = vpop.permute.xlu0 %1446
      %1448 = vrot.lane.b32.xlu0 %v480, 32
      %v1449 = vpop.permute.xlu0 %1448
      %1450 = vrot.lane.b32.xlu0 %v481, 32
      %v1451 = vpop.permute.xlu0 %1450
      %1452 = vrot.lane.b32.xlu0 %v482, 32
      %v1453 = vpop.permute.xlu0 %1452
      %1454 = vrot.lane.b32.xlu0 %v483, 32
      %v1455 = vpop.permute.xlu0 %1454
      %1456 = vrot.lane.b32.xlu0 %v484, 32
      %v1457 = vpop.permute.xlu0 %1456
      %1458 = vrot.lane.b32.xlu0 %v485, 32
      %v1459 = vpop.permute.xlu0 %1458
      %1460 = vrot.lane.b32.xlu0 %v486, 32
      %v1461 = vpop.permute.xlu0 %1460
      %1462 = vrot.lane.b32.xlu0 %v487, 32
      %v1463 = vpop.permute.xlu0 %1462
      %1464 = vrot.lane.b32.xlu0 %v488, 32
      %v1465 = vpop.permute.xlu0 %1464
      %1466 = vrot.lane.b32.xlu0 %v489, 32
      %v1467 = vpop.permute.xlu0 %1466
      %1468 = vrot.lane.b32.xlu0 %v490, 32
      %v1469 = vpop.permute.xlu0 %1468
      %1470 = vrot.lane.b32.xlu0 %v491, 32
      %v1471 = vpop.permute.xlu0 %1470
      %1472 = vrot.lane.b32.xlu0 %v492, 32
      %v1473 = vpop.permute.xlu0 %1472
      %1474 = vrot.lane.b32.xlu0 %v493, 32
      %v1475 = vpop.permute.xlu0 %1474
      %1476 = vrot.lane.b32.xlu0 %v494, 32
      %v1477 = vpop.permute.xlu0 %1476
      %1478 = vrot.lane.b32.xlu0 %v495, 32
      %v1479 = vpop.permute.xlu0 %1478
      %1480 = vrot.lane.b32.xlu0 %v496, 32
      %v1481 = vpop.permute.xlu0 %1480
      %1482 = vrot.lane.b32.xlu0 %v497, 32
      %v1483 = vpop.permute.xlu0 %1482
      %1484 = vrot.lane.b32.xlu0 %v498, 32
      %v1485 = vpop.permute.xlu0 %1484
      %1486 = vrot.lane.b32.xlu0 %v499, 32
      %v1487 = vpop.permute.xlu0 %1486
      %1488 = vrot.lane.b32.xlu0 %v500, 32
      %v1489 = vpop.permute.xlu0 %1488
      %1490 = vrot.lane.b32.xlu0 %v501, 32
      %v1491 = vpop.permute.xlu0 %1490
      %1492 = vrot.lane.b32.xlu0 %v502, 32
      %v1493 = vpop.permute.xlu0 %1492
      %1494 = vrot.lane.b32.xlu0 %v503, 32
      %v1495 = vpop.permute.xlu0 %1494
      %vm1528 = vcmask 31744
      %v1529 = vsel %vm1528, %v214, %v537
      %v1530 = vsel %vm1528, %v215, %v539
      %v1531 = vsel %vm1528, %v216, %v541
      %v1532 = vsel %vm1528, %v217, %v543
      %v1533 = vsel %vm1528, %v218, %v545
      %v1534 = vsel %vm1528, %v219, %v547
      %v1535 = vsel %vm1528, %v220, %v549
      %v1536 = vsel %vm1528, %v221, %v551
      %v1537 = vsel %vm1528, %v222, %v553
      %v1538 = vsel %vm1528, %v223, %v555
      %v1539 = vsel %vm1528, %v224, %v557
      %v1540 = vsel %vm1528, %v225, %v559
      %v1541 = vsel %vm1528, %v226, %v561
      %v1542 = vsel %vm1528, %v227, %v563
      %v1543 = vsel %vm1528, %v228, %v565
      %v1544 = vsel %vm1528, %v229, %v567
      %v1545 = vsel %vm1528, %v230, %v569
      %v1546 = vsel %vm1528, %v231, %v571
      %v1547 = vsel %vm1528, %v232, %v573
      %v1548 = vsel %vm1528, %v233, %v575
      %v1549 = vsel %vm1528, %v234, %v577
      %v1550 = vsel %vm1528, %v235, %v579
      %v1551 = vsel %vm1528, %v236, %v581
      %v1552 = vsel %vm1528, %v237, %v583
      %v1553 = vsel %vm1528, %v238, %v585
      %v1554 = vsel %vm1528, %v239, %v587
      %v1555 = vsel %vm1528, %v240, %v589
      %v1556 = vsel %vm1528, %v241, %v591
      %v1557 = vsel %vm1528, %v242, %v593
      %v1558 = vsel %vm1528, %v243, %v595
      %v1559 = vsel %vm1528, %v244, %v597
      %v1560 = vsel %vm1528, %v245, %v599
      %vm1561 = vcmask 64512
      %v1562 = vsel %vm1561, %v1529, %v665
      %v1563 = vsel %vm1561, %v1530, %v667
      %v1564 = vsel %vm1561, %v1531, %v669
      %v1565 = vsel %vm1561, %v1532, %v671
      %v1566 = vsel %vm1561, %v1533, %v673
      %v1567 = vsel %vm1561, %v1534, %v675
      %v1568 = vsel %vm1561, %v1535, %v677
      %v1569 = vsel %vm1561, %v1536, %v679
      %v1570 = vsel %vm1561, %v1537, %v681
      %v1571 = vsel %vm1561, %v1538, %v683
      %v1572 = vsel %vm1561, %v1539, %v685
      %v1573 = vsel %vm1561, %v1540, %v687
      %v1574 = vsel %vm1561, %v1541, %v689
      %v1575 = vsel %vm1561, %v1542, %v691
      %v1576 = vsel %vm1561, %v1543, %v693
      %v1577 = vsel %vm1561, %v1544, %v695
      %v1578 = vsel %vm1561, %v1545, %v697
      %v1579 = vsel %vm1561, %v1546, %v699
      %v1580 = vsel %vm1561, %v1547, %v701
      %v1581 = vsel %vm1561, %v1548, %v703
      %v1582 = vsel %vm1561, %v1549, %v705
      %v1583 = vsel %vm1561, %v1550, %v707
      %v1584 = vsel %vm1561, %v1551, %v709
      %v1585 = vsel %vm1561, %v1552, %v711
      %v1586 = vsel %vm1561, %v1553, %v713
      %v1587 = vsel %vm1561, %v1554, %v715
      %v1588 = vsel %vm1561, %v1555, %v717
      %v1589 = vsel %vm1561, %v1556, %v719
      %v1590 = vsel %vm1561, %v1557, %v721
      %v1591 = vsel %vm1561, %v1558, %v723
      %v1592 = vsel %vm1561, %v1559, %v725
      %v1593 = vsel %vm1561, %v1560, %v727
      %vm1594 = vcmask 97280
      %v1595 = vsel %vm1594, %v1562, %v793
      %v1596 = vsel %vm1594, %v1563, %v795
      %v1597 = vsel %vm1594, %v1564, %v797
      %v1598 = vsel %vm1594, %v1565, %v799
      %v1599 = vsel %vm1594, %v1566, %v801
      %v1600 = vsel %vm1594, %v1567, %v803
      %v1601 = vsel %vm1594, %v1568, %v805
      %v1602 = vsel %vm1594, %v1569, %v807
      %v1603 = vsel %vm1594, %v1570, %v809
      %v1604 = vsel %vm1594, %v1571, %v811
      %v1605 = vsel %vm1594, %v1572, %v813
      %v1606 = vsel %vm1594, %v1573, %v815
      %v1607 = vsel %vm1594, %v1574, %v817
      %v1608 = vsel %vm1594, %v1575, %v819
      %v1609 = vsel %vm1594, %v1576, %v821
      %v1610 = vsel %vm1594, %v1577, %v823
      %v1611 = vsel %vm1594, %v1578, %v825
      %v1612 = vsel %vm1594, %v1579, %v827
      %v1613 = vsel %vm1594, %v1580, %v829
      %v1614 = vsel %vm1594, %v1581, %v831
      %v1615 = vsel %vm1594, %v1582, %v833
      %v1616 = vsel %vm1594, %v1583, %v835
      %v1617 = vsel %vm1594, %v1584, %v837
      %v1618 = vsel %vm1594, %v1585, %v839
      %v1619 = vsel %vm1594, %v1586, %v841
      %v1620 = vsel %vm1594, %v1587, %v843
      %v1621 = vsel %vm1594, %v1588, %v845
      %v1622 = vsel %vm1594, %v1589, %v847
      %v1623 = vsel %vm1594, %v1590, %v849
      %v1624 = vsel %vm1594, %v1591, %v851
      %v1625 = vsel %vm1594, %v1592, %v853
      %v1626 = vsel %vm1594, %v1593, %v855
      %vm1627 = vcmask 130048
      %v1628 = vsel %vm1627, %v1595, %v921
      %v1629 = vsel %vm1627, %v1596, %v923
      %v1630 = vsel %vm1627, %v1597, %v925
      %v1631 = vsel %vm1627, %v1598, %v927
      %v1632 = vsel %vm1627, %v1599, %v929
      %v1633 = vsel %vm1627, %v1600, %v931
      %v1634 = vsel %vm1627, %v1601, %v933
      %v1635 = vsel %vm1627, %v1602, %v935
      %v1636 = vsel %vm1627, %v1603, %v937
      %v1637 = vsel %vm1627, %v1604, %v939
      %v1638 = vsel %vm1627, %v1605, %v941
      %v1639 = vsel %vm1627, %v1606, %v943
      %v1640 = vsel %vm1627, %v1607, %v945
      %v1641 = vsel %vm1627, %v1608, %v947
      %v1642 = vsel %vm1627, %v1609, %v949
      %v1643 = vsel %vm1627, %v1610, %v951
      %v1644 = vsel %vm1627, %v1611, %v953
      %v1645 = vsel %vm1627, %v1612, %v955
      %v1646 = vsel %vm1627, %v1613, %v957
      %v1647 = vsel %vm1627, %v1614, %v959
      %v1648 = vsel %vm1627, %v1615, %v961
      %v1649 = vsel %vm1627, %v1616, %v963
      %v1650 = vsel %vm1627, %v1617, %v965
      %v1651 = vsel %vm1627, %v1618, %v967
      %v1652 = vsel %vm1627, %v1619, %v969
      %v1653 = vsel %vm1627, %v1620, %v971
      %v1654 = vsel %vm1627, %v1621, %v973
      %v1655 = vsel %vm1627, %v1622, %v975
      %v1656 = vsel %vm1627, %v1623, %v977
      %v1657 = vsel %vm1627, %v1624, %v979
      %v1658 = vsel %vm1627, %v1625, %v981
      %v1659 = vsel %vm1627, %v1626, %v983
      %vm1660 = vcmask 162816
      %v1661 = vsel %vm1660, %v1628, %v1049
      %v1662 = vsel %vm1660, %v1629, %v1051
      %v1663 = vsel %vm1660, %v1630, %v1053
      %v1664 = vsel %vm1660, %v1631, %v1055
      %v1665 = vsel %vm1660, %v1632, %v1057
      %v1666 = vsel %vm1660, %v1633, %v1059
      %v1667 = vsel %vm1660, %v1634, %v1061
      %v1668 = vsel %vm1660, %v1635, %v1063
      %v1669 = vsel %vm1660, %v1636, %v1065
      %v1670 = vsel %vm1660, %v1637, %v1067
      %v1671 = vsel %vm1660, %v1638, %v1069
      %v1672 = vsel %vm1660, %v1639, %v1071
      %v1673 = vsel %vm1660, %v1640, %v1073
      %v1674 = vsel %vm1660, %v1641, %v1075
      %v1675 = vsel %vm1660, %v1642, %v1077
      %v1676 = vsel %vm1660, %v1643, %v1079
      %v1677 = vsel %vm1660, %v1644, %v1081
      %v1678 = vsel %vm1660, %v1645, %v1083
      %v1679 = vsel %vm1660, %v1646, %v1085
      %v1680 = vsel %vm1660, %v1647, %v1087
      %v1681 = vsel %vm1660, %v1648, %v1089
      %v1682 = vsel %vm1660, %v1649, %v1091
      %v1683 = vsel %vm1660, %v1650, %v1093
      %v1684 = vsel %vm1660, %v1651, %v1095
      %v1685 = vsel %vm1660, %v1652, %v1097
      %v1686 = vsel %vm1660, %v1653, %v1099
      %v1687 = vsel %vm1660, %v1654, %v1101
      %v1688 = vsel %vm1660, %v1655, %v1103
      %v1689 = vsel %vm1660, %v1656, %v1105
      %v1690 = vsel %vm1660, %v1657, %v1107
      %v1691 = vsel %vm1660, %v1658, %v1109
      %v1692 = vsel %vm1660, %v1659, %v1111
      %vm1693 = vcmask 195584
      %v1694 = vsel %vm1693, %v1661, %v1177
      %v1695 = vsel %vm1693, %v1662, %v1179
      %v1696 = vsel %vm1693, %v1663, %v1181
      %v1697 = vsel %vm1693, %v1664, %v1183
      %v1698 = vsel %vm1693, %v1665, %v1185
      %v1699 = vsel %vm1693, %v1666, %v1187
      %v1700 = vsel %vm1693, %v1667, %v1189
      %v1701 = vsel %vm1693, %v1668, %v1191
      %v1702 = vsel %vm1693, %v1669, %v1193
      %v1703 = vsel %vm1693, %v1670, %v1195
      %v1704 = vsel %vm1693, %v1671, %v1197
      %v1705 = vsel %vm1693, %v1672, %v1199
      %v1706 = vsel %vm1693, %v1673, %v1201
      %v1707 = vsel %vm1693, %v1674, %v1203
      %v1708 = vsel %vm1693, %v1675, %v1205
      %v1709 = vsel %vm1693, %v1676, %v1207
      %v1710 = vsel %vm1693, %v1677, %v1209
      %v1711 = vsel %vm1693, %v1678, %v1211
      %v1712 = vsel %vm1693, %v1679, %v1213
      %v1713 = vsel %vm1693, %v1680, %v1215
      %v1714 = vsel %vm1693, %v1681, %v1217
      %v1715 = vsel %vm1693, %v1682, %v1219
      %v1716 = vsel %vm1693, %v1683, %v1221
      %v1717 = vsel %vm1693, %v1684, %v1223
      %v1718 = vsel %vm1693, %v1685, %v1225
      %v1719 = vsel %vm1693, %v1686, %v1227
      %v1720 = vsel %vm1693, %v1687, %v1229
      %v1721 = vsel %vm1693, %v1688, %v1231
      %v1722 = vsel %vm1693, %v1689, %v1233
      %v1723 = vsel %vm1693, %v1690, %v1235
      %v1724 = vsel %vm1693, %v1691, %v1237
      %v1725 = vsel %vm1693, %v1692, %v1239
      %vm1726 = vcmask 228352
      %v1727 = vsel %vm1726, %v1694, %v1305
      %v1728 = vsel %vm1726, %v1695, %v1307
      %v1729 = vsel %vm1726, %v1696, %v1309
      %v1730 = vsel %vm1726, %v1697, %v1311
      %v1731 = vsel %vm1726, %v1698, %v1313
      %v1732 = vsel %vm1726, %v1699, %v1315
      %v1733 = vsel %vm1726, %v1700, %v1317
      %v1734 = vsel %vm1726, %v1701, %v1319
      %v1735 = vsel %vm1726, %v1702, %v1321
      %v1736 = vsel %vm1726, %v1703, %v1323
      %v1737 = vsel %vm1726, %v1704, %v1325
      %v1738 = vsel %vm1726, %v1705, %v1327
      %v1739 = vsel %vm1726, %v1706, %v1329
      %v1740 = vsel %vm1726, %v1707, %v1331
      %v1741 = vsel %vm1726, %v1708, %v1333
      %v1742 = vsel %vm1726, %v1709, %v1335
      %v1743 = vsel %vm1726, %v1710, %v1337
      %v1744 = vsel %vm1726, %v1711, %v1339
      %v1745 = vsel %vm1726, %v1712, %v1341
      %v1746 = vsel %vm1726, %v1713, %v1343
      %v1747 = vsel %vm1726, %v1714, %v1345
      %v1748 = vsel %vm1726, %v1715, %v1347
      %v1749 = vsel %vm1726, %v1716, %v1349
      %v1750 = vsel %vm1726, %v1717, %v1351
      %v1751 = vsel %vm1726, %v1718, %v1353
      %v1752 = vsel %vm1726, %v1719, %v1355
      %v1753 = vsel %vm1726, %v1720, %v1357
      %v1754 = vsel %vm1726, %v1721, %v1359
      %v1755 = vsel %vm1726, %v1722, %v1361
      %v1756 = vsel %vm1726, %v1723, %v1363
      %v1757 = vsel %vm1726, %v1724, %v1365
      %v1758 = vsel %vm1726, %v1725, %v1367
      %vm1759 = vcmask 261120
      %v1760 = vsel %vm1759, %v1727, %v1433
      %v1761 = vsel %vm1759, %v1728, %v1435
      %v1762 = vsel %vm1759, %v1729, %v1437
      %v1763 = vsel %vm1759, %v1730, %v1439
      %v1764 = vsel %vm1759, %v1731, %v1441
      %v1765 = vsel %vm1759, %v1732, %v1443
      %v1766 = vsel %vm1759, %v1733, %v1445
      %v1767 = vsel %vm1759, %v1734, %v1447
      %v1768 = vsel %vm1759, %v1735, %v1449
      %v1769 = vsel %vm1759, %v1736, %v1451
      %v1770 = vsel %vm1759, %v1737, %v1453
      %v1771 = vsel %vm1759, %v1738, %v1455
      %v1772 = vsel %vm1759, %v1739, %v1457
      %v1773 = vsel %vm1759, %v1740, %v1459
      %v1774 = vsel %vm1759, %v1741, %v1461
      %v1775 = vsel %vm1759, %v1742, %v1463
      %v1776 = vsel %vm1759, %v1743, %v1465
      %v1777 = vsel %vm1759, %v1744, %v1467
      %v1778 = vsel %vm1759, %v1745, %v1469
      %v1779 = vsel %vm1759, %v1746, %v1471
      %v1780 = vsel %vm1759, %v1747, %v1473
      %v1781 = vsel %vm1759, %v1748, %v1475
      %v1782 = vsel %vm1759, %v1749, %v1477
      %v1783 = vsel %vm1759, %v1750, %v1479
      %v1784 = vsel %vm1759, %v1751, %v1481
      %v1785 = vsel %vm1759, %v1752, %v1483
      %v1786 = vsel %vm1759, %v1753, %v1485
      %v1787 = vsel %vm1759, %v1754, %v1487
      %v1788 = vsel %vm1759, %v1755, %v1489
      %v1789 = vsel %vm1759, %v1756, %v1491
      %v1790 = vsel %vm1759, %v1757, %v1493
      %v1791 = vsel %vm1759, %v1758, %v1495
      %v1792 = vld [vmem:[%s205] sm:$0xff]
      %v1793 = vld [vmem:[%s205 + $0x8] sm:$0xff]
      %v1794 = vld [vmem:[%s205 + $0x10] sm:$0xff]
      %v1795 = vld [vmem:[%s205 + $0x18] sm:$0xff]
      %v1796 = vld [vmem:[%s205 + $0x20] sm:$0xf]
      %v1797 = vld [vmem:[%s208] sm:$0x1]
      %v1799 = vlaneseq
      %v1800 = vshrl.u32 %v1799, 7
      %v1801 = vsub.s32 0, %v1800
      %v1802 = vrot.slane %v1797, %v1801
      %vm1804 = vcmask 293888
      %v1806 = vsel %vm1804, %v1760, 0
      %v1809 = vsel %vm1804, %v1761, 0
      %v1812 = vsel %vm1804, %v1762, 0
      %v1815 = vsel %vm1804, %v1763, 0
      %v1818 = vsel %vm1804, %v1764, 0
      %v1821 = vsel %vm1804, %v1765, 0
      %v1824 = vsel %vm1804, %v1766, 0
      %v1827 = vsel %vm1804, %v1767, 0
      %v1830 = vsel %vm1804, %v1768, 0
      %v1833 = vsel %vm1804, %v1769, 0
      %v1836 = vsel %vm1804, %v1770, 0
      %v1839 = vsel %vm1804, %v1771, 0
      %v1842 = vsel %vm1804, %v1772, 0
      %v1845 = vsel %vm1804, %v1773, 0
      %v1848 = vsel %vm1804, %v1774, 0
      %v1851 = vsel %vm1804, %v1775, 0
      %v1854 = vsel %vm1804, %v1776, 0
      %v1857 = vsel %vm1804, %v1777, 0
      %v1860 = vsel %vm1804, %v1778, 0
      %v1863 = vsel %vm1804, %v1779, 0
      %v1866 = vsel %vm1804, %v1780, 0
      %v1869 = vsel %vm1804, %v1781, 0
      %v1872 = vsel %vm1804, %v1782, 0
      %v1875 = vsel %vm1804, %v1783, 0
      %v1878 = vsel %vm1804, %v1784, 0
      %v1881 = vsel %vm1804, %v1785, 0
      %v1884 = vsel %vm1804, %v1786, 0
      %v1887 = vsel %vm1804, %v1787, 0
      %v1890 = vsel %vm1804, %v1788, 0
      %v1893 = vsel %vm1804, %v1789, 0
      %v1896 = vsel %vm1804, %v1790, 0
      %v1899 = vsel %vm1804, %v1791, 0
      %vm1901 = vcmask 1043456
      %v1903 = vsel %vm1901, %v1796, 0
      %1905 = vmatprep.subr.mxu0 0.0
      %1906 = vmatpush1.msra.mxu0 0.0
      %1907 = vmatprep.subr.mxu0 0.0
      %1908 = vmatpush1.msra.mxu0 0.0
      %1909 = vmatprep.subr.mxu0 0.0
      %1910 = vmatpush1.msra.mxu0 0.0
      %1911 = vmatprep.subr.mxu0 0.0
      %1912 = vmatpush1.msra.mxu0 0.0
      %1913 = vmatprep.subr.mxu0 0.0
      %1914 = vmatpush1.msra.mxu0 0.0
      %1915 = vmatprep.subr.mxu0 0.0
      %1916 = vmatpush1.msra.mxu0 0.0
      %1917 = vmatprep.subr.mxu0 0.0
      %1918 = vmatpush1.msra.mxu0 0.0
      %1919 = vmatprep.subr.mxu0 0.0
      %1920 = vmatpush1.msra.mxu0 0.0
      %1921 = vmatprep.subr.mxu0 0.0
      %1922 = vmatpush1.msra.mxu0 0.0
      %1923 = vmatprep.subr.mxu0 0.0
      %1924 = vmatpush1.msra.mxu0 0.0
      %1925 = vmatprep.subr.mxu0 0.0
      %1926 = vmatpush1.msra.mxu0 0.0
      %1927 = vmatprep.subr.mxu0 0.0
      %1928 = vmatpush1.msra.mxu0 %v1903
      %1929 = vmatprep.subr.mxu0 0.0
      %1930 = vmatpush1.msra.mxu0 %v1795
      %1931 = vmatprep.subr.mxu0 0.0
      %1932 = vmatpush1.msra.mxu0 %v1794
      %1933 = vmatprep.subr.mxu0 0.0
      %1934 = vmatpush1.msra.mxu0 %v1793
      %1935 = vmatprep.subr.mxu0 0.0
      %1936 = vmatpush1.msra.mxu0 %v1792
      %1937 = vmatprep.subr.mxu0 0.0
      %1938 = vmatpush2.msra.mxu0 0.0
      %1939 = vmatprep.subr.mxu0 0.0
      %1940 = vmatpush2.msra.mxu0 0.0
      %1941 = vmatprep.subr.mxu0 0.0
      %1942 = vmatpush2.msra.mxu0 0.0
      %1943 = vmatprep.subr.mxu0 0.0
      %1944 = vmatpush2.msra.mxu0 0.0
      %1945 = vmatprep.subr.mxu0 0.0
      %1946 = vmatpush2.msra.mxu0 0.0
      %1947 = vmatprep.subr.mxu0 0.0
      %1948 = vmatpush2.msra.mxu0 0.0
      %1949 = vmatprep.subr.mxu0 0.0
      %1950 = vmatpush2.msra.mxu0 0.0
      %1951 = vmatprep.subr.mxu0 0.0
      %1952 = vmatpush2.msra.mxu0 0.0
      %1953 = vmatprep.subr.mxu0 0.0
      %1954 = vmatpush2.msra.mxu0 0.0
      %1955 = vmatprep.subr.mxu0 0.0
      %1956 = vmatpush2.msra.mxu0 0.0
      %1957 = vmatprep.subr.mxu0 0.0
      %1958 = vmatpush2.msra.mxu0 0.0
      %1959 = vmatprep.subr.mxu0 0.0
      %1960 = vmatpush2.msra.mxu0 0.0
      %1961 = vmatprep.subr.mxu0 0.0
      %1962 = vmatpush2.msra.mxu0 0.0
      %1963 = vmatprep.subr.mxu0 0.0
      %1964 = vmatpush2.msra.mxu0 0.0
      %1965 = vmatprep.subr.mxu0 0.0
      %1966 = vmatpush2.msra.mxu0 0.0
      %1967 = vmatprep.subr.mxu0 0.0
      %1968 = vmatpush2.msra.mxu0 0.0
      %1969 = vmatprep.mubr.f32.mxu0 0.0
      %1970 = vmatmul.mubr.f32.gmra.mxu0 %v1806
      %v1971 = vpop.f32.mrf.mxu0
      %v1972 = vadd.f32 %v1802, %v1971
      %v1973 = vpop.f32.mrf.mxu0
      %1974 = vmatprep.mubr.f32.mxu0 0.0
      %1975 = vmatmul.mubr.f32.gmra.mxu0 %v1809
      %v1976 = vpop.f32.mrf.mxu0
      %v1977 = vadd.f32 %v1802, %v1976
      %v1978 = vpop.f32.mrf.mxu0
      %1979 = vmatprep.mubr.f32.mxu0 0.0
      %1980 = vmatmul.mubr.f32.gmra.mxu0 %v1812
      %v1981 = vpop.f32.mrf.mxu0
      %v1982 = vadd.f32 %v1802, %v1981
      %v1983 = vpop.f32.mrf.mxu0
      %1984 = vmatprep.mubr.f32.mxu0 0.0
      %1985 = vmatmul.mubr.f32.gmra.mxu0 %v1815
      %v1986 = vpop.f32.mrf.mxu0
      %v1987 = vadd.f32 %v1802, %v1986
      %v1988 = vpop.f32.mrf.mxu0
      %1989 = vmatprep.mubr.f32.mxu0 0.0
      %1990 = vmatmul.mubr.f32.gmra.mxu0 %v1818
      %v1991 = vpop.f32.mrf.mxu0
      %v1992 = vadd.f32 %v1802, %v1991
      %v1993 = vpop.f32.mrf.mxu0
      %1994 = vmatprep.mubr.f32.mxu0 0.0
      %1995 = vmatmul.mubr.f32.gmra.mxu0 %v1821
      %v1996 = vpop.f32.mrf.mxu0
      %v1997 = vadd.f32 %v1802, %v1996
      %v1998 = vpop.f32.mrf.mxu0
      %1999 = vmatprep.mubr.f32.mxu0 0.0
      %2000 = vmatmul.mubr.f32.gmra.mxu0 %v1824
      %v2001 = vpop.f32.mrf.mxu0
      %v2002 = vadd.f32 %v1802, %v2001
      %v2003 = vpop.f32.mrf.mxu0
      %2004 = vmatprep.mubr.f32.mxu0 0.0
      %2005 = vmatmul.mubr.f32.gmra.mxu0 %v1827
      %v2006 = vpop.f32.mrf.mxu0
      %v2007 = vadd.f32 %v1802, %v2006
      %v2008 = vpop.f32.mrf.mxu0
      %2009 = vmatprep.mubr.f32.mxu0 0.0
      %2010 = vmatmul.mubr.f32.gmra.mxu0 %v1830
      %v2011 = vpop.f32.mrf.mxu0
      %v2012 = vadd.f32 %v1802, %v2011
      %v2013 = vpop.f32.mrf.mxu0
      %2014 = vmatprep.mubr.f32.mxu0 0.0
      %2015 = vmatmul.mubr.f32.gmra.mxu0 %v1833
      %v2016 = vpop.f32.mrf.mxu0
      %v2017 = vadd.f32 %v1802, %v2016
      %v2018 = vpop.f32.mrf.mxu0
      %2019 = vmatprep.mubr.f32.mxu0 0.0
      %2020 = vmatmul.mubr.f32.gmra.mxu0 %v1836
      %v2021 = vpop.f32.mrf.mxu0
      %v2022 = vadd.f32 %v1802, %v2021
      %v2023 = vpop.f32.mrf.mxu0
      %2024 = vmatprep.mubr.f32.mxu0 0.0
      %2025 = vmatmul.mubr.f32.gmra.mxu0 %v1839
      %v2026 = vpop.f32.mrf.mxu0
      %v2027 = vadd.f32 %v1802, %v2026
      %v2028 = vpop.f32.mrf.mxu0
      %2029 = vmatprep.mubr.f32.mxu0 0.0
      %2030 = vmatmul.mubr.f32.gmra.mxu0 %v1842
      %v2031 = vpop.f32.mrf.mxu0
      %v2032 = vadd.f32 %v1802, %v2031
      %v2033 = vpop.f32.mrf.mxu0
      %2034 = vmatprep.mubr.f32.mxu0 0.0
      %2035 = vmatmul.mubr.f32.gmra.mxu0 %v1845
      %v2036 = vpop.f32.mrf.mxu0
      %v2037 = vadd.f32 %v1802, %v2036
      %v2038 = vpop.f32.mrf.mxu0
      %2039 = vmatprep.mubr.f32.mxu0 0.0
      %2040 = vmatmul.mubr.f32.gmra.mxu0 %v1848
      %v2041 = vpop.f32.mrf.mxu0
      %v2042 = vadd.f32 %v1802, %v2041
      %v2043 = vpop.f32.mrf.mxu0
      %2044 = vmatprep.mubr.f32.mxu0 0.0
      %2045 = vmatmul.mubr.f32.gmra.mxu0 %v1851
      %v2046 = vpop.f32.mrf.mxu0
      %v2047 = vadd.f32 %v1802, %v2046
      %v2048 = vpop.f32.mrf.mxu0
      %2049 = vmatprep.mubr.f32.mxu0 0.0
      %2050 = vmatmul.mubr.f32.gmra.mxu0 %v1854
      %v2051 = vpop.f32.mrf.mxu0
      %v2052 = vadd.f32 %v1802, %v2051
      %v2053 = vpop.f32.mrf.mxu0
      %2054 = vmatprep.mubr.f32.mxu0 0.0
      %2055 = vmatmul.mubr.f32.gmra.mxu0 %v1857
      %v2056 = vpop.f32.mrf.mxu0
      %v2057 = vadd.f32 %v1802, %v2056
      %v2058 = vpop.f32.mrf.mxu0
      %2059 = vmatprep.mubr.f32.mxu0 0.0
      %2060 = vmatmul.mubr.f32.gmra.mxu0 %v1860
      %v2061 = vpop.f32.mrf.mxu0
      %v2062 = vadd.f32 %v1802, %v2061
      %v2063 = vpop.f32.mrf.mxu0
      %2064 = vmatprep.mubr.f32.mxu0 0.0
      %2065 = vmatmul.mubr.f32.gmra.mxu0 %v1863
      %v2066 = vpop.f32.mrf.mxu0
      %v2067 = vadd.f32 %v1802, %v2066
      %v2068 = vpop.f32.mrf.mxu0
      %2069 = vmatprep.mubr.f32.mxu0 0.0
      %2070 = vmatmul.mubr.f32.gmra.mxu0 %v1866
      %v2071 = vpop.f32.mrf.mxu0
      %v2072 = vadd.f32 %v1802, %v2071
      %v2073 = vpop.f32.mrf.mxu0
      %2074 = vmatprep.mubr.f32.mxu0 0.0
      %2075 = vmatmul.mubr.f32.gmra.mxu0 %v1869
      %v2076 = vpop.f32.mrf.mxu0
      %v2077 = vadd.f32 %v1802, %v2076
      %v2078 = vpop.f32.mrf.mxu0
      %2079 = vmatprep.mubr.f32.mxu0 0.0
      %2080 = vmatmul.mubr.f32.gmra.mxu0 %v1872
      %v2081 = vpop.f32.mrf.mxu0
      %v2082 = vadd.f32 %v1802, %v2081
      %v2083 = vpop.f32.mrf.mxu0
      %2084 = vmatprep.mubr.f32.mxu0 0.0
      %2085 = vmatmul.mubr.f32.gmra.mxu0 %v1875
      %v2086 = vpop.f32.mrf.mxu0
      %v2087 = vadd.f32 %v1802, %v2086
      %v2088 = vpop.f32.mrf.mxu0
      %2089 = vmatprep.mubr.f32.mxu0 0.0
      %2090 = vmatmul.mubr.f32.gmra.mxu0 %v1878
      %v2091 = vpop.f32.mrf.mxu0
      %v2092 = vadd.f32 %v1802, %v2091
      %v2093 = vpop.f32.mrf.mxu0
      %2094 = vmatprep.mubr.f32.mxu0 0.0
      %2095 = vmatmul.mubr.f32.gmra.mxu0 %v1881
      %v2096 = vpop.f32.mrf.mxu0
      %v2097 = vadd.f32 %v1802, %v2096
      %v2098 = vpop.f32.mrf.mxu0
      %2099 = vmatprep.mubr.f32.mxu0 0.0
      %2100 = vmatmul.mubr.f32.gmra.mxu0 %v1884
      %v2101 = vpop.f32.mrf.mxu0
      %v2102 = vadd.f32 %v1802, %v2101
      %v2103 = vpop.f32.mrf.mxu0
      %2104 = vmatprep.mubr.f32.mxu0 0.0
      %2105 = vmatmul.mubr.f32.gmra.mxu0 %v1887
      %v2106 = vpop.f32.mrf.mxu0
      %v2107 = vadd.f32 %v1802, %v2106
      %v2108 = vpop.f32.mrf.mxu0
      %2109 = vmatprep.mubr.f32.mxu0 0.0
      %2110 = vmatmul.mubr.f32.gmra.mxu0 %v1890
      %v2111 = vpop.f32.mrf.mxu0
      %v2112 = vadd.f32 %v1802, %v2111
      %v2113 = vpop.f32.mrf.mxu0
      %2114 = vmatprep.mubr.f32.mxu0 0.0
      %2115 = vmatmul.mubr.f32.gmra.mxu0 %v1893
      %v2116 = vpop.f32.mrf.mxu0
      %v2117 = vadd.f32 %v1802, %v2116
      %v2118 = vpop.f32.mrf.mxu0
      %2119 = vmatprep.mubr.f32.mxu0 0.0
      %2120 = vmatmul.mubr.f32.gmra.mxu0 %v1896
      %v2121 = vpop.f32.mrf.mxu0
      %v2122 = vadd.f32 %v1802, %v2121
      %v2123 = vpop.f32.mrf.mxu0
      %2124 = vmatprep.mubr.f32.mxu0 0.0
      %2125 = vmatmul.mubr.f32.gmra.mxu0 %v1899
      %v2126 = vpop.f32.mrf.mxu0
      %v2127 = vadd.f32 %v1802, %v2126
      %v2128 = vpop.f32.mrf.mxu0
      %2129 = vdwg.mxu0
      %2130 = vst.msk [vmem:[%s213] sm:$0xff] %vm1561, %v1972
      %2131 = vst.msk [vmem:[%s213 + $0x8] sm:$0xff] %vm1561, %v1977
      %2132 = vst.msk [vmem:[%s213 + $0x10] sm:$0xff] %vm1561, %v1982
      %2133 = vst.msk [vmem:[%s213 + $0x18] sm:$0xff] %vm1561, %v1987
      %2134 = vst.msk [vmem:[%s213 + $0x20] sm:$0xff] %vm1561, %v1992
      %2135 = vst.msk [vmem:[%s213 + $0x28] sm:$0xff] %vm1561, %v1997
      %2136 = vst.msk [vmem:[%s213 + $0x30] sm:$0xff] %vm1561, %v2002
      %2137 = vst.msk [vmem:[%s213 + $0x38] sm:$0xff] %vm1561, %v2007
      %2138 = vst.msk [vmem:[%s213 + $0x40] sm:$0xff] %vm1561, %v2012
      %2139 = vst.msk [vmem:[%s213 + $0x48] sm:$0xff] %vm1561, %v2017
      %2140 = vst.msk [vmem:[%s213 + $0x50] sm:$0xff] %vm1561, %v2022
      %2141 = vst.msk [vmem:[%s213 + $0x58] sm:$0xff] %vm1561, %v2027
      %2142 = vst.msk [vmem:[%s213 + $0x60] sm:$0xff] %vm1561, %v2032
      %2143 = vst.msk [vmem:[%s213 + $0x68] sm:$0xff] %vm1561, %v2037
      %2144 = vst.msk [vmem:[%s213 + $0x70] sm:$0xff] %vm1561, %v2042
      %2145 = vst.msk [vmem:[%s213 + $0x78] sm:$0xff] %vm1561, %v2047
      %2146 = vst.msk [vmem:[%s213 + $0x80] sm:$0xff] %vm1561, %v2052
      %2147 = vst.msk [vmem:[%s213 + $0x88] sm:$0xff] %vm1561, %v2057
      %2148 = vst.msk [vmem:[%s213 + $0x90] sm:$0xff] %vm1561, %v2062
      %2149 = vst.msk [vmem:[%s213 + $0x98] sm:$0xff] %vm1561, %v2067
      %2150 = vst.msk [vmem:[%s213 + $0xa0] sm:$0xff] %vm1561, %v2072
      %2151 = vst.msk [vmem:[%s213 + $0xa8] sm:$0xff] %vm1561, %v2077
      %2152 = vst.msk [vmem:[%s213 + $0xb0] sm:$0xff] %vm1561, %v2082
      %2153 = vst.msk [vmem:[%s213 + $0xb8] sm:$0xff] %vm1561, %v2087
      %2154 = vst.msk [vmem:[%s213 + $0xc0] sm:$0xff] %vm1561, %v2092
      %2155 = vst.msk [vmem:[%s213 + $0xc8] sm:$0xff] %vm1561, %v2097
      %2156 = vst.msk [vmem:[%s213 + $0xd0] sm:$0xff] %vm1561, %v2102
      %2157 = vst.msk [vmem:[%s213 + $0xd8] sm:$0xff] %vm1561, %v2107
      %2158 = vst.msk [vmem:[%s213 + $0xe0] sm:$0xff] %vm1561, %v2112
      %2159 = vst.msk [vmem:[%s213 + $0xe8] sm:$0xff] %vm1561, %v2117
      %2160 = vst.msk [vmem:[%s213 + $0xf0] sm:$0xff] %vm1561, %v2122
      %2161 = vst.msk [vmem:[%s213 + $0xf8] sm:$0xff] %vm1561, %v2127
      %p2162 = scmp.lt.s32.totalorder %s19, 1
      %s2163 = scalar_select %p2162, %s19, 1
      %s2164 = smul.addr %s2163, 32
      %s2165 = smul.addr %s2164, 8
      %s2166 = scalar_lea.vmem %s3, %s2165
      // Predicated region
      $region33: #{conv2d_pallas.1} parent=31 // pred_check
        %p2167 = pneg %p122
      $region34: #{conv2d_pallas.1} parent=31 // pred_check_branch
        %2169 = sbr.rel (%p2167) target = $region36
      $region35: #{conv2d_pallas.1} parent=31 // pred_region
        _
      $region36: #{conv2d_pallas.1} parent=31 // pred_fallthru
        _
    $region32: #{conv2d_pallas.1} parent=5 // pred_fallthru
      _
    %p2170 = scmp.le.s32.totalorder 2, %s9
    // Predicated region
    $region37: #{conv2d_pallas.1} parent=5 // pred_check
      %p2171 = pneg %p2170
    $region38: #{conv2d_pallas.1} parent=5 // pred_check_branch
      %2173 = sbr.rel (%p2171) target = $region40
    $region39: #{conv2d_pallas.1} parent=5 // pred_region
      %s2174 = ssub.s32 %s9, 2
      // Predicated region
      $region41: #{conv2d_pallas.1} parent=39 // pred_check
        %p2175 = pneg %p128
      $region42: #{conv2d_pallas.1} parent=39 // pred_check_branch
        %2177 = sbr.rel (%p2175) target = $region44
      $region43: #{conv2d_pallas.1} parent=39 // pred_region
        %p2178 = scmp.lt.s32.totalorder %s21, 1
        %s2179 = scalar_select %p2178, %s21, 1
        %s2180 = smul.addr %s2179, 32
        %s2181 = smul.addr %s2180, 8
        %s2182 = scalar_lea.vmem %s3, %s2181
      $region44: #{conv2d_pallas.1} parent=39 // pred_fallthru
        _
    $region40: #{conv2d_pallas.1} parent=5 // pred_fallthru
      _
  $region6: #{conv2d_pallas.1} parent=0 // loop_footer
    %s13 = sadd.s32 1, %s9
  $region7: #{conv2d_pallas.1} parent=0 // loop_footer_branch
    %8 = sbr.rel target = $region3
  $region8: #{conv2d_pallas.1} parent=0 // loop_exit
    _

</llo_original>
